<compile_context>
chip_gen: v5e
topology: v5e:2x2
jax: 0.10.0
libtpu: 0.0.40
codegen_flags: <defaults>
</compile_context>

<pallas_src>
import functools

import jax
import jax.numpy as jnp
from jax import lax
from jax.experimental import pallas as pl
from jax.experimental.pallas import tpu as pltpu

EPS = 1e-5
_BF16 = jnp.bfloat16
_VMEM_LIMIT = 32 * 1024 * 1024          # safe on v5e/v6e (128 MiB) and v7x (64 MiB)


def _pick_spatial_tile(hw):
    for ts in (512, 256, 128):
        if hw % ts == 0:
            return ts
    return hw


# --------------------------------------------------------------------------- #
# Stage 1: conv1 (1x1) + fused per-tile BN1 partial statistics
# --------------------------------------------------------------------------- #
def _conv1x1_stats_kernel(x_ref, w_ref, y_ref, st_ref):
    x = x_ref[0]                                     # (Cin, TS)  f32
    w = w_ref[...]                                   # (Cmid, Cin) f32
    y = jnp.dot(w.astype(_BF16), x.astype(_BF16),
                preferred_element_type=jnp.float32)  # (Cmid, TS) f32 (MXU)
    y_ref[0] = y
    s = jnp.sum(y, axis=1, keepdims=True)            # per-channel partial sum
    q = jnp.sum(y * y, axis=1, keepdims=True)        # per-channel partial sumsq
    st_ref[0, 0] = jnp.concatenate([s, q], axis=1)   # (Cmid, 2)


# --------------------------------------------------------------------------- #
# Stage 2: bn1 + relu -> conv2 (3x3, pad=1) + fused BN2 partial statistics
# --------------------------------------------------------------------------- #
def _bn_relu_conv3x3_stats_kernel(H, W, yp_ref, sc_ref, w2g_ref,
                                  o_ref, st_ref, ys_ref):
    # yp_ref : (1, Cmid, (H+2)*W) f32  -- y1 zero-padded by one row top & bottom
    # sc_ref : (2, Cmid, 1)            -- packed bn1 scale / shift
    # w2g_ref: (3, Cmid, 3*Cmid)       -- kx-grouped conv2 weights, K = (ky, ci)
    # ys_ref : VMEM scratch (3*Cmid, H*W) f32 -- row-stacked activation operand
    Cmid = o_ref.shape[1]
    HW = H * W

    yp = yp_ref[0]                                   # (Cmid, (H+2)*W)
    a = sc_ref[0]                                    # (Cmid, 1)
    c = sc_ref[1]
    act = jnp.maximum(yp * a + c, 0.0)               # bn1 + relu (f32, VPU)

    # the padded halo rows must be zero *after* bn1+relu -> re-zero them
    lane = lax.broadcasted_iota(jnp.int32, (1, (H + 2) * W), 1)
    interior = jnp.logical_and(lane >= W, lane < (H + 1) * W)
    act = jnp.where(interior, act, 0.0)

    # row-stacked (ky = 0,1,2) windows of the padded slab -> (3*Cmid, H*W)
    ys_ref[0 * Cmid:1 * Cmid, :] = act[:, 0 * W:0 * W + HW]
    ys_ref[1 * Cmid:2 * Cmid, :] = act[:, 1 * W:1 * W + HW]
    ys_ref[2 * Cmid:3 * Cmid, :] = act[:, 2 * W:2 * W + HW]
    ystack = ys_ref[...]                             # (3*Cmid, HW) f32

    col = lax.broadcasted_iota(jnp.int32, (1, HW), 1) % W

    def col_shift(s):
        # result[:, p] = ystack[:, p + s] when column w+s is in [0, W), else 0
        if s > 0:
            shifted = jnp.concatenate(
                [ystack[:, s:], jnp.zeros((3 * Cmid, s), ystack.dtype)], axis=1)
            return jnp.where(col < (W - s), shifted, 0.0)
        shifted = jnp.concatenate(
            [jnp.zeros((3 * Cmid, -s), ystack.dtype), ystack[:, :s]], axis=1)
        return jnp.where(col >= (-s), shifted, 0.0)

    # 3 fat matmuls (K = 3*Cmid), accumulator initialized by the first dot
    acc = jnp.dot(w2g_ref[0].astype(_BF16), col_shift(-1).astype(_BF16),
                  preferred_element_type=jnp.float32)
    acc += jnp.dot(w2g_ref[1].astype(_BF16), ystack.astype(_BF16),
                   preferred_element_type=jnp.float32)
    acc += jnp.dot(w2g_ref[2].astype(_BF16), col_shift(1).astype(_BF16),
                   preferred_element_type=jnp.float32)

    o_ref[0] = acc
    s = jnp.sum(acc, axis=1, keepdims=True)
    q = jnp.sum(acc * acc, axis=1, keepdims=True)
    st_ref[0] = jnp.concatenate([s, q], axis=1)      # (Cmid, 2)


# --------------------------------------------------------------------------- #
# Stage 3: bn2 + relu -> conv3 (1x1) + fused BN3 partial statistics
# --------------------------------------------------------------------------- #
def _bn_relu_conv1x1_stats_kernel(y_ref, sc_ref, w_ref, o_ref, st_ref):
    y = y_ref[0]                                     # (Cmid, TS)
    a = sc_ref[0]
    c = sc_ref[1]
    act = jnp.maximum(y * a + c, 0.0)                # bn2 + relu (f32)
    z = jnp.dot(w_ref[...].astype(_BF16), act.astype(_BF16),
                preferred_element_type=jnp.float32)  # (Cout, TS)
    o_ref[0] = z
    s = jnp.sum(z, axis=1, keepdims=True)
    q = jnp.sum(z * z, axis=1, keepdims=True)
    st_ref[0, 0] = jnp.concatenate([s, q], axis=1)   # (Cout, 2)


# --------------------------------------------------------------------------- #
# Stage 4: bn3 + residual add + relu
# --------------------------------------------------------------------------- #
def _bn_residual_relu_kernel(y_ref, x_ref, sc_ref, o_ref):
    a = sc_ref[0]
    c = sc_ref[1]
    o_ref[0] = jnp.maximum(y_ref[0] * a + c + x_ref[0], 0.0)


# --------------------------------------------------------------------------- #
# JAX glue: reduce per-tile (sum, sumsq) partials into a packed BN scale/shift
# --------------------------------------------------------------------------- #
def _bn_scale_shift(stats, gamma, beta, count):
    C = stats.shape[-2]
    s = stats[..., 0].reshape(-1, C).sum(axis=0)
    q = stats[..., 1].reshape(-1, C).sum(axis=0)
    mean = s / count
    var = jnp.maximum(q / count - mean * mean, 0.0)
    inv = lax.rsqrt(var + EPS)
    a = gamma * inv
    c = beta - mean * a
    return jnp.stack([a, c], axis=0).reshape(2, C, 1).astype(jnp.float32)


# --------------------------------------------------------------------------- #
# Wrapper: full Bottleneck forward (PyTorch-layout params, NCHW activations)
# --------------------------------------------------------------------------- #
def bottleneck_pallas(x_nchw, params):
    (w1, g1, b1, w2, g2, b2, w3, g3, b3) = params
    N, Cin, H, W = x_nchw.shape
    Cmid = w1.shape[0]
    Cout = w3.shape[0]
    assert Cout == Cin, "stride=1 / downsample=None requires inplanes == planes*4"

    HW = H * W
    TS = _pick_spatial_tile(HW)
    n_sp = HW // TS
    M = float(N * HW)

    cp2 = pltpu.CompilerParams(dimension_semantics=("parallel", "parallel"),
                               vmem_limit_bytes=_VMEM_LIMIT)
    cp1 = pltpu.CompilerParams(dimension_semantics=("parallel",),
                               vmem_limit_bytes=_VMEM_LIMIT)

    x3 = x_nchw.reshape(N, Cin, HW).astype(jnp.float32)
    w1_2d = w1.reshape(Cmid, Cin).astype(jnp.float32)
    w3_2d = w3.reshape(Cout, Cmid).astype(jnp.float32)
    # kx-grouped conv2 weights: w2g[kx][co, ky*Cmid + ci] = w2[co, ci, ky, kx]
    w2g = jnp.stack([w2[:, :, :, kx].transpose(0, 2, 1).reshape(Cmid, 3 * Cmid)
                     for kx in range(3)], axis=0).astype(jnp.float32)

    # ---- stage 1: conv1 + BN1 partial stats --------------------------------
    y1, st1 = pl.pallas_call(
        _conv1x1_stats_kernel,
        grid=(N, n_sp),
        in_specs=[
            pl.BlockSpec((1, Cin, TS), lambda n, j: (n, 0, j)),
            pl.BlockSpec((Cmid, Cin), lambda n, j: (0, 0)),
        ],
        out_specs=(
            pl.BlockSpec((1, Cmid, TS), lambda n, j: (n, 0, j)),
            pl.BlockSpec((1, 1, Cmid, 2), lambda n, j: (n, j, 0, 0)),
        ),
        out_shape=(
            jax.ShapeDtypeStruct((N, Cmid, HW), jnp.float32),
            jax.ShapeDtypeStruct((N, n_sp, Cmid, 2), jnp.float32),
        ),
        compiler_params=cp2,
    )(x3, w1_2d)
    sc1 = _bn_scale_shift(st1, g1, b1, M)

    # ---- stage 2: bn1+relu -> conv2 (3x3) + BN2 partial stats --------------
    y1p = jnp.pad(y1.reshape(N, Cmid, H, W),
                  ((0, 0), (0, 0), (1, 1), (0, 0))).reshape(N, Cmid, (H + 2) * W)
    y2, st2 = pl.pallas_call(
        functools.partial(_bn_relu_conv3x3_stats_kernel, H, W),
        grid=(N,),
        in_specs=[
            pl.BlockSpec((1, Cmid, (H + 2) * W), lambda n: (n, 0, 0)),
            pl.BlockSpec((2, Cmid, 1), lambda n: (0, 0, 0)),
            pl.BlockSpec((3, Cmid, 3 * Cmid), lambda n: (0, 0, 0)),
        ],
        out_specs=(
            pl.BlockSpec((1, Cmid, HW), lambda n: (n, 0, 0)),
            pl.BlockSpec((1, Cmid, 2), lambda n: (n, 0, 0)),
        ),
        out_shape=(
            jax.ShapeDtypeStruct((N, Cmid, HW), jnp.float32),
            jax.ShapeDtypeStruct((N, Cmid, 2), jnp.float32),
        ),
        scratch_shapes=[pltpu.VMEM((3 * Cmid, HW), jnp.float32)],
        compiler_params=cp1,
    )(y1p, sc1, w2g)
    sc2 = _bn_scale_shift(st2, g2, b2, M)

    # ---- stage 3: bn2+relu -> conv3 + BN3 partial stats ---------------------
    y3, st3 = pl.pallas_call(
        _bn_relu_conv1x1_stats_kernel,
        grid=(N, n_sp),
        in_specs=[
            pl.BlockSpec((1, Cmid, TS), lambda n, j: (n, 0, j)),
            pl.BlockSpec((2, Cmid, 1), lambda n, j: (0, 0, 0)),
            pl.BlockSpec((Cout, Cmid), lambda n, j: (0, 0)),
        ],
        out_specs=(
            pl.BlockSpec((1, Cout, TS), lambda n, j: (n, 0, j)),
            pl.BlockSpec((1, 1, Cout, 2), lambda n, j: (n, j, 0, 0)),
        ),
        out_shape=(
            jax.ShapeDtypeStruct((N, Cout, HW), jnp.float32),
            jax.ShapeDtypeStruct((N, n_sp, Cout, 2), jnp.float32),
        ),
        compiler_params=cp2,
    )(y2, sc2, w3_2d)
    sc3 = _bn_scale_shift(st3, g3, b3, M)

    # ---- stage 4: bn3 + residual add + relu ---------------------------------
    out = pl.pallas_call(
        _bn_residual_relu_kernel,
        grid=(N, n_sp),
        in_specs=[
            pl.BlockSpec((1, Cout, TS), lambda n, j: (n, 0, j)),
            pl.BlockSpec((1, Cout, TS), lambda n, j: (n, 0, j)),
            pl.BlockSpec((2, Cout, 1), lambda n, j: (0, 0, 0)),
        ],
        out_specs=pl.BlockSpec((1, Cout, TS), lambda n, j: (n, 0, j)),
        out_shape=jax.ShapeDtypeStruct((N, Cout, HW), jnp.float32),
        compiler_params=cp2,
    )(y3, x3, sc3)

    return out.reshape(N, Cout, H, W)


# --------------------------------------------------------------------------- #
# Pure-JAX references
# --------------------------------------------------------------------------- #
def _bn_ref(y, g, b):
    mean = y.mean(axis=(0, 2, 3), keepdims=True)
    var = y.var(axis=(0, 2, 3), keepdims=True)
    return (y - mean) * lax.rsqrt(var + EPS) * g.reshape(1, -1, 1, 1) \
        + b.reshape(1, -1, 1, 1)


def bottleneck_ref_f32(x, params):
    (w1, g1, b1, w2, g2, b2, w3, g3, b3) = params
    conv = lambda a, w, pad: lax.conv_general_dilated(
        a, w, (1, 1), pad, dimension_numbers=('NCHW', 'OIHW', 'NCHW'))
    o = jax.nn.relu(_bn_ref(conv(x, w1, 'VALID'), g1, b1))
    o = jax.nn.relu(_bn_ref(conv(o, w2, ((1, 1), (1, 1))), g2, b2))
    o = _bn_ref(conv(o, w3, 'VALID'), g3, b3)
    return jax.nn.relu(o + x)


def bottleneck_ref_policy(x, params):
    # Same precision policy as the kernel: bf16 MXU operands, f32 accumulation,
    # f32 BatchNorm / ReLU / residual.
    (w1, g1, b1, w2, g2, b2, w3, g3, b3) = params
    conv = lambda a, w, pad: lax.conv_general_dilated(
        a.astype(_BF16), w.astype(_BF16), (1, 1), pad,
        dimension_numbers=('NCHW', 'OIHW', 'NCHW'),
        preferred_element_type=jnp.float32)
    o = jax.nn.relu(_bn_ref(conv(x, w1, 'VALID'), g1, b1))
    o = jax.nn.relu(_bn_ref(conv(o, w2, ((1, 1), (1, 1))), g2, b2))
    o = _bn_ref(conv(o, w3, 'VALID'), g3, b3)
    return jax.nn.relu(o + x)


if __name__ == "__main__":
    # Module config: planes=4, expansion=4 -> inplanes=16, stride=1, no downsample
    planes = 4
    inplanes = planes * 4
    N, H, W = 2, 16, 16

    key = jax.random.PRNGKey(0)
    ks = jax.random.split(key, 10)

    x = jax.random.normal(ks[0], (N, inplanes, H, W), jnp.float32)

    # parameters in native PyTorch layouts (conv: OIHW, bn: (C,))
    w1 = 0.1 * jax.random.normal(ks[1], (planes, inplanes, 1, 1), jnp.float32)
    w2 = 0.1 * jax.random.normal(ks[2], (planes, planes, 3, 3), jnp.float32)
    w3 = 0.1 * jax.random.normal(ks[3], (planes * 4, planes, 1, 1), jnp.float32)
    g1 = 1.0 + 0.1 * jax.random.normal(ks[4], (planes,), jnp.float32)
    b1 = 0.1 * jax.random.normal(ks[5], (planes,), jnp.float32)
    g2 = 1.0 + 0.1 * jax.random.normal(ks[6], (planes,), jnp.float32)
    b2 = 0.1 * jax.random.normal(ks[7], (planes,), jnp.float32)
    g3 = 1.0 + 0.1 * jax.random.normal(ks[8], (planes * 4,), jnp.float32)
    b3 = 0.1 * jax.random.normal(ks[9], (planes * 4,), jnp.float32)

    params = (w1, g1, b1, w2, g2, b2, w3, g3, b3)

    fwd = jax.jit(bottleneck_pallas)
    out = jax.block_until_ready(fwd(x, params))

    ref_pol = jax.block_until_ready(jax.jit(bottleneck_ref_policy)(x, params))
    ref_f32 = jax.block_until_ready(jax.jit(bottleneck_ref_f32)(x, params))

    assert out.shape == (N, inplanes, H, W)

    # strict check vs a reference that uses the identical bf16-MXU/f32-accum policy
    err_pol = float(jnp.max(jnp.abs(out - ref_pol)))
    assert jnp.allclose(out, ref_pol, atol=2e-3, rtol=2e-3), \
        f"policy-ref max abs err = {err_pol}"

    # sanity check vs the exact-f32 module semantics (deviation = bf16 MXU policy)
    rel = float(jnp.linalg.norm(out - ref_f32) / (jnp.linalg.norm(ref_f32) + 1e-12))
    assert rel < 2e-2, f"f32-ref relative error = {rel}"

    print("KERNEL_OK")
</pallas_src>

<mosaic_0001>
module attributes {stable_mosaic.version = 11 : i64} {
  func.func @_conv1x1_stats_kernel(%arg0: i32, %arg1: i32, %arg2: memref<1x16x256xf32, #tpu.memory_space<vmem>>, %arg3: memref<4x16xf32, #tpu.memory_space<vmem>>, %arg4: memref<1x4x256xf32, #tpu.memory_space<vmem>>, %arg5: memref<1x1x4x2xf32, #tpu.memory_space<vmem>>) attributes {dimension_semantics = [#tpu.dimension_semantics<parallel>, #tpu.dimension_semantics<parallel>], iteration_bounds = array<i64: 2, 1>, scalar_prefetch = 0 : i64, scratch_operands = 0 : i64, tpu.core_type = #tpu.core_type<tc>, window_params = [{transform_indices = @transform_0, window_bounds = array<i64: 1, 16, 256>}, {pipeline_mode = #tpu.pipeline_mode<synchronous>, transform_indices = @transform_1, window_bounds = array<i64: 4, 16>}, {transform_indices = @transform_2, window_bounds = array<i64: 1, 4, 256>}, {transform_indices = @transform_3, window_bounds = array<i64: 1, 1, 4, 2>}]} {
    %c0 = arith.constant 0 : index
    %c0_0 = arith.constant 0 : index
    %c0_1 = arith.constant 0 : index
    %0 = vector.load %arg2[%c0, %c0_0, %c0_1] : memref<1x16x256xf32, #tpu.memory_space<vmem>>, vector<1x16x256xf32>
    %1 = vector.shape_cast %0 : vector<1x16x256xf32> to vector<16x256xf32>
    %c0_2 = arith.constant 0 : index
    %c0_3 = arith.constant 0 : index
    %2 = vector.load %arg3[%c0_2, %c0_3] : memref<4x16xf32, #tpu.memory_space<vmem>>, vector<4x16xf32>
    %3 = arith.truncf %2 : vector<4x16xf32> to vector<4x16xbf16>
    %4 = arith.truncf %1 : vector<16x256xf32> to vector<16x256xbf16>
    %cst = arith.constant dense<0.000000e+00> : vector<4x256xf32>
    %5 = tpu.matmul %3, %4, %cst {dimension_numbers = #tpu.dot_dimension_numbers<[1], [0], [0], [1], [0, 0, 1, 1], [], []>} : vector<4x16xbf16>, vector<16x256xbf16>, vector<4x256xf32> -> vector<4x256xf32>
    %c0_4 = arith.constant 0 : index
    %c0_5 = arith.constant 0 : index
    %c0_6 = arith.constant 0 : index
    %6 = vector.load %arg4[%c0_4, %c0_5, %c0_6] : memref<1x4x256xf32, #tpu.memory_space<vmem>>, vector<1x4x256xf32>
    %7 = vector.shape_cast %6 : vector<1x4x256xf32> to vector<4x256xf32>
    %8 = vector.shape_cast %5 : vector<4x256xf32> to vector<1x4x256xf32>
    tpu.vector_store %arg4[%c0_4, %c0_5, %c0_6], %8 {strides = array<i32>} : memref<1x4x256xf32, #tpu.memory_space<vmem>>, vector<1x4x256xf32>,
    %cst_7 = arith.constant dense<0.000000e+00> : vector<4xf32>
    %9 = vector.multi_reduction <add>, %5, %cst_7 [1] : vector<4x256xf32> to vector<4xf32>
    %10 = vector.shape_cast %9 : vector<4xf32> to vector<4x1xf32>
    %11 = arith.mulf %5, %5 : vector<4x256xf32>
    %cst_8 = arith.constant dense<0.000000e+00> : vector<4xf32>
    %12 = vector.multi_reduction <add>, %11, %cst_8 [1] : vector<4x256xf32> to vector<4xf32>
    %13 = vector.shape_cast %12 : vector<4xf32> to vector<4x1xf32>
    %14 = tpu.concatenate %10, %13 in 1 : vector<4x1xf32>, vector<4x1xf32> -> vector<4x2xf32>
    %c0_9 = arith.constant 0 : index
    %c0_10 = arith.constant 0 : index
    %c0_11 = arith.constant 0 : index
    %c0_12 = arith.constant 0 : index
    %15 = vector.load %arg5[%c0_9, %c0_10, %c0_11, %c0_12] : memref<1x1x4x2xf32, #tpu.memory_space<vmem>>, vector<1x1x4x2xf32>
    %16 = vector.shape_cast %15 : vector<1x1x4x2xf32> to vector<4x2xf32>
    %17 = vector.shape_cast %14 : vector<4x2xf32> to vector<1x1x4x2xf32>
    tpu.vector_store %arg5[%c0_9, %c0_10, %c0_11, %c0_12], %17 {strides = array<i32>} : memref<1x1x4x2xf32, #tpu.memory_space<vmem>>, vector<1x1x4x2xf32>,
    return
  }
  func.func @transform_0(%arg0: i32, %arg1: i32) -> (i32, i32, i32) {
    %c0_i32 = arith.constant 0 : i32
    %c0_i32_0 = arith.constant 0 : i32
    return %arg0, %c0_i32, %arg1 : i32, i32, i32
  }
  func.func @transform_1(%arg0: i32, %arg1: i32) -> (i32, i32) {
    %c0_i32 = arith.constant 0 : i32
    %c0_i32_0 = arith.constant 0 : i32
    %c0_i32_1 = arith.constant 0 : i32
    return %c0_i32, %c0_i32_0 : i32, i32
  }
  func.func @transform_2(%arg0: i32, %arg1: i32) -> (i32, i32, i32) {
    %c0_i32 = arith.constant 0 : i32
    %c0_i32_0 = arith.constant 0 : i32
    return %arg0, %c0_i32, %arg1 : i32, i32, i32
  }
  func.func @transform_3(%arg0: i32, %arg1: i32) -> (i32, i32, i32, i32) {
    %c0_i32 = arith.constant 0 : i32
    %c0_i32_0 = arith.constant 0 : i32
    %c0_i32_1 = arith.constant 0 : i32
    return %arg0, %arg1, %c0_i32, %c0_i32_0 : i32, i32, i32, i32
  }
}

module attributes {stable_mosaic.version = 11 : i64} {
  func.func @_bn_relu_conv1x1_stats_kernel(%arg0: i32, %arg1: i32, %arg2: memref<1x4x256xf32, #tpu.memory_space<vmem>>, %arg3: memref<2x4x1xf32, #tpu.memory_space<vmem>>, %arg4: memref<16x4xf32, #tpu.memory_space<vmem>>, %arg5: memref<1x16x256xf32, #tpu.memory_space<vmem>>, %arg6: memref<1x1x16x2xf32, #tpu.memory_space<vmem>>) attributes {dimension_semantics = [#tpu.dimension_semantics<parallel>, #tpu.dimension_semantics<parallel>], iteration_bounds = array<i64: 2, 1>, scalar_prefetch = 0 : i64, scratch_operands = 0 : i64, tpu.core_type = #tpu.core_type<tc>, window_params = [{transform_indices = @transform_0, window_bounds = array<i64: 1, 4, 256>}, {pipeline_mode = #tpu.pipeline_mode<synchronous>, transform_indices = @transform_1, window_bounds = array<i64: 2, 4, 1>}, {pipeline_mode = #tpu.pipeline_mode<synchronous>, transform_indices = @transform_2, window_bounds = array<i64: 16, 4>}, {transform_indices = @transform_3, window_bounds = array<i64: 1, 16, 256>}, {transform_indices = @transform_4, window_bounds = array<i64: 1, 1, 16, 2>}]} {
    %c0 = arith.constant 0 : index
    %c0_0 = arith.constant 0 : index
    %c0_1 = arith.constant 0 : index
    %0 = vector.load %arg2[%c0, %c0_0, %c0_1] : memref<1x4x256xf32, #tpu.memory_space<vmem>>, vector<1x4x256xf32>
    %1 = vector.shape_cast %0 : vector<1x4x256xf32> to vector<4x256xf32>
    %c0_2 = arith.constant 0 : index
    %c0_3 = arith.constant 0 : index
    %c0_4 = arith.constant 0 : index
    %2 = vector.load %arg3[%c0_2, %c0_3, %c0_4] : memref<2x4x1xf32, #tpu.memory_space<vmem>>, vector<1x4x1xf32>
    %3 = vector.shape_cast %2 : vector<1x4x1xf32> to vector<4x1xf32>
    %c1 = arith.constant 1 : index
    %c0_5 = arith.constant 0 : index
    %c0_6 = arith.constant 0 : index
    %4 = vector.load %arg3[%c1, %c0_5, %c0_6] : memref<2x4x1xf32, #tpu.memory_space<vmem>>, vector<1x4x1xf32>
    %5 = vector.shape_cast %4 : vector<1x4x1xf32> to vector<4x1xf32>
    %6 = vector.broadcast %3 : vector<4x1xf32> to vector<4x256xf32>
    %7 = arith.mulf %1, %6 : vector<4x256xf32>
    %8 = vector.broadcast %5 : vector<4x1xf32> to vector<4x256xf32>
    %9 = arith.addf %7, %8 : vector<4x256xf32>
    %cst = arith.constant 0.000000e+00 : f32
    %10 = vector.broadcast %cst : f32 to vector<4x256xf32>
    %11 = arith.maximumf %9, %10 : vector<4x256xf32>
    %c0_7 = arith.constant 0 : index
    %c0_8 = arith.constant 0 : index
    %12 = vector.load %arg4[%c0_7, %c0_8] : memref<16x4xf32, #tpu.memory_space<vmem>>, vector<16x4xf32>
    %13 = arith.truncf %12 : vector<16x4xf32> to vector<16x4xbf16>
    %14 = arith.truncf %11 : vector<4x256xf32> to vector<4x256xbf16>
    %cst_9 = arith.constant dense<0.000000e+00> : vector<16x256xf32>
    %15 = tpu.matmul %13, %14, %cst_9 {dimension_numbers = #tpu.dot_dimension_numbers<[1], [0], [0], [1], [0, 0, 1, 1], [], []>} : vector<16x4xbf16>, vector<4x256xbf16>, vector<16x256xf32> -> vector<16x256xf32>
    %c0_10 = arith.constant 0 : index
    %c0_11 = arith.constant 0 : index
    %c0_12 = arith.constant 0 : index
    %16 = vector.load %arg5[%c0_10, %c0_11, %c0_12] : memref<1x16x256xf32, #tpu.memory_space<vmem>>, vector<1x16x256xf32>
    %17 = vector.shape_cast %16 : vector<1x16x256xf32> to vector<16x256xf32>
    %18 = vector.shape_cast %15 : vector<16x256xf32> to vector<1x16x256xf32>
    tpu.vector_store %arg5[%c0_10, %c0_11, %c0_12], %18 {strides = array<i32>} : memref<1x16x256xf32, #tpu.memory_space<vmem>>, vector<1x16x256xf32>,
    %cst_13 = arith.constant dense<0.000000e+00> : vector<16xf32>
    %19 = vector.multi_reduction <add>, %15, %cst_13 [1] : vector<16x256xf32> to vector<16xf32>
    %20 = vector.shape_cast %19 : vector<16xf32> to vector<16x1xf32>
    %21 = arith.mulf %15, %15 : vector<16x256xf32>
    %cst_14 = arith.constant dense<0.000000e+00> : vector<16xf32>
    %22 = vector.multi_reduction <add>, %21, %cst_14 [1] : vector<16x256xf32> to vector<16xf32>
    %23 = vector.shape_cast %22 : vector<16xf32> to vector<16x1xf32>
    %24 = tpu.concatenate %20, %23 in 1 : vector<16x1xf32>, vector<16x1xf32> -> vector<16x2xf32>
    %c0_15 = arith.constant 0 : index
    %c0_16 = arith.constant 0 : index
    %c0_17 = arith.constant 0 : index
    %c0_18 = arith.constant 0 : index
    %25 = vector.load %arg6[%c0_15, %c0_16, %c0_17, %c0_18] : memref<1x1x16x2xf32, #tpu.memory_space<vmem>>, vector<1x1x16x2xf32>
    %26 = vector.shape_cast %25 : vector<1x1x16x2xf32> to vector<16x2xf32>
    %27 = vector.shape_cast %24 : vector<16x2xf32> to vector<1x1x16x2xf32>
    tpu.vector_store %arg6[%c0_15, %c0_16, %c0_17, %c0_18], %27 {strides = array<i32>} : memref<1x1x16x2xf32, #tpu.memory_space<vmem>>, vector<1x1x16x2xf32>,
    return
  }
  func.func @transform_0(%arg0: i32, %arg1: i32) -> (i32, i32, i32) {
    %c0_i32 = arith.constant 0 : i32
    %c0_i32_0 = arith.constant 0 : i32
    return %arg0, %c0_i32, %arg1 : i32, i32, i32
  }
  func.func @transform_1(%arg0: i32, %arg1: i32) -> (i32, i32, i32) {
    %c0_i32 = arith.constant 0 : i32
    %c0_i32_0 = arith.constant 0 : i32
    %c0_i32_1 = arith.constant 0 : i32
    %c0_i32_2 = arith.constant 0 : i32
    return %c0_i32, %c0_i32_0, %c0_i32_1 : i32, i32, i32
  }
  func.func @transform_2(%arg0: i32, %arg1: i32) -> (i32, i32) {
    %c0_i32 = arith.constant 0 : i32
    %c0_i32_0 = arith.constant 0 : i32
    %c0_i32_1 = arith.constant 0 : i32
    return %c0_i32, %c0_i32_0 : i32, i32
  }
  func.func @transform_3(%arg0: i32, %arg1: i32) -> (i32, i32, i32) {
    %c0_i32 = arith.constant 0 : i32
    %c0_i32_0 = arith.constant 0 : i32
    return %arg0, %c0_i32, %arg1 : i32, i32, i32
  }
  func.func @transform_4(%arg0: i32, %arg1: i32) -> (i32, i32, i32, i32) {
    %c0_i32 = arith.constant 0 : i32
    %c0_i32_0 = arith.constant 0 : i32
    %c0_i32_1 = arith.constant 0 : i32
    return %arg0, %arg1, %c0_i32, %c0_i32_0 : i32, i32, i32, i32
  }
}

module attributes {stable_mosaic.version = 11 : i64} {
  func.func @_bn_relu_conv3x3_stats_kernel(%arg0: i32, %arg1: memref<1x4x288xf32, #tpu.memory_space<vmem>>, %arg2: memref<2x4x1xf32, #tpu.memory_space<vmem>>, %arg3: memref<3x4x12xf32, #tpu.memory_space<vmem>>, %arg4: memref<1x4x256xf32, #tpu.memory_space<vmem>>, %arg5: memref<1x4x2xf32, #tpu.memory_space<vmem>>, %arg6: memref<12x256xf32, #tpu.memory_space<vmem>>) attributes {dimension_semantics = [#tpu.dimension_semantics<parallel>], iteration_bounds = array<i64: 2>, scalar_prefetch = 0 : i64, scratch_operands = 1 : i64, tpu.core_type = #tpu.core_type<tc>, window_params = [{transform_indices = @transform_0, window_bounds = array<i64: 1, 4, 288>}, {pipeline_mode = #tpu.pipeline_mode<synchronous>, transform_indices = @transform_1, window_bounds = array<i64: 2, 4, 1>}, {pipeline_mode = #tpu.pipeline_mode<synchronous>, transform_indices = @transform_2, window_bounds = array<i64: 3, 4, 12>}, {transform_indices = @transform_3, window_bounds = array<i64: 1, 4, 256>}, {transform_indices = @transform_4, window_bounds = array<i64: 1, 4, 2>}]} {
    %c0 = arith.constant 0 : index
    %c0_0 = arith.constant 0 : index
    %c0_1 = arith.constant 0 : index
    %0 = vector.load %arg1[%c0, %c0_0, %c0_1] : memref<1x4x288xf32, #tpu.memory_space<vmem>>, vector<1x4x288xf32>
    %1 = vector.shape_cast %0 : vector<1x4x288xf32> to vector<4x288xf32>
    %c0_2 = arith.constant 0 : index
    %c0_3 = arith.constant 0 : index
    %c0_4 = arith.constant 0 : index
    %2 = vector.load %arg2[%c0_2, %c0_3, %c0_4] : memref<2x4x1xf32, #tpu.memory_space<vmem>>, vector<1x4x1xf32>
    %3 = vector.shape_cast %2 : vector<1x4x1xf32> to vector<4x1xf32>
    %c1 = arith.constant 1 : index
    %c0_5 = arith.constant 0 : index
    %c0_6 = arith.constant 0 : index
    %4 = vector.load %arg2[%c1, %c0_5, %c0_6] : memref<2x4x1xf32, #tpu.memory_space<vmem>>, vector<1x4x1xf32>
    %5 = vector.shape_cast %4 : vector<1x4x1xf32> to vector<4x1xf32>
    %6 = vector.broadcast %3 : vector<4x1xf32> to vector<4x288xf32>
    %7 = arith.mulf %1, %6 : vector<4x288xf32>
    %8 = vector.broadcast %5 : vector<4x1xf32> to vector<4x288xf32>
    %9 = arith.addf %7, %8 : vector<4x288xf32>
    %cst = arith.constant 0.000000e+00 : f32
    %10 = vector.broadcast %cst : f32 to vector<4x288xf32>
    %11 = arith.maximumf %9, %10 : vector<4x288xf32>
    %12 = tpu.iota {dimensions = array<i32: 1>} : vector<1x288xi32>
    %c16_i32 = arith.constant 16 : i32
    %13 = vector.broadcast %c16_i32 : i32 to vector<1x288xi32>
    %14 = arith.cmpi sge, %12, %13 : vector<1x288xi32>
    %c272_i32 = arith.constant 272 : i32
    %15 = vector.broadcast %c272_i32 : i32 to vector<1x288xi32>
    %16 = arith.cmpi slt, %12, %15 : vector<1x288xi32>
    %17 = arith.andi %14, %16 : vector<1x288xi1>
    %cst_7 = arith.constant 0.000000e+00 : f32
    %18 = vector.shape_cast %17 : vector<1x288xi1> to vector<1x288xi1>
    %19 = vector.broadcast %18 : vector<1x288xi1> to vector<4x288xi1>
    %20 = vector.broadcast %cst_7 : f32 to vector<4x288xf32>
    %21 = arith.select %19, %11, %20 : vector<4x288xi1>, vector<4x288xf32>
    %22 = vector.extract_strided_slice %21 {offsets = [0, 0], sizes = [4, 256], strides = [1, 1]} : vector<4x288xf32> to vector<4x256xf32>
    %c0_8 = arith.constant 0 : index
    %c0_9 = arith.constant 0 : index
    %23 = vector.load %arg6[%c0_8, %c0_9] : memref<12x256xf32, #tpu.memory_space<vmem>>, vector<4x256xf32>
    tpu.vector_store %arg6[%c0_8, %c0_9], %22 {strides = array<i32>} : memref<12x256xf32, #tpu.memory_space<vmem>>, vector<4x256xf32>,
    %24 = vector.extract_strided_slice %21 {offsets = [0, 16], sizes = [4, 256], strides = [1, 1]} : vector<4x288xf32> to vector<4x256xf32>
    %c4 = arith.constant 4 : index
    %c0_10 = arith.constant 0 : index
    %25 = vector.load %arg6[%c4, %c0_10] : memref<12x256xf32, #tpu.memory_space<vmem>>, vector<4x256xf32>
    tpu.vector_store %arg6[%c4, %c0_10], %24 {strides = array<i32>} : memref<12x256xf32, #tpu.memory_space<vmem>>, vector<4x256xf32>,
    %26 = vector.extract_strided_slice %21 {offsets = [0, 32], sizes = [4, 256], strides = [1, 1]} : vector<4x288xf32> to vector<4x256xf32>
    %c8 = arith.constant 8 : index
    %c0_11 = arith.constant 0 : index
    %27 = vector.load %arg6[%c8, %c0_11] : memref<12x256xf32, #tpu.memory_space<vmem>>, vector<4x256xf32>
    tpu.vector_store %arg6[%c8, %c0_11], %26 {strides = array<i32>} : memref<12x256xf32, #tpu.memory_space<vmem>>, vector<4x256xf32>,
    %c0_12 = arith.constant 0 : index
    %c0_13 = arith.constant 0 : index
    %28 = vector.load %arg6[%c0_12, %c0_13] : memref<12x256xf32, #tpu.memory_space<vmem>>, vector<12x256xf32>
    %29 = tpu.iota {dimensions = array<i32: 1>} : vector<1x256xi32>
    %c16_i32_14 = arith.constant 16 : i32
    %c0_i32 = arith.constant 0 : i32
    %30 = arith.cmpi eq, %c16_i32_14, %c0_i32 : i32
    %c1_i32 = arith.constant 1 : i32
    %31 = arith.select %30, %c1_i32, %c16_i32_14 : i32
    %32 = vector.broadcast %31 : i32 to vector<1x256xi32>
    %33 = arith.remsi %29, %32 : vector<1x256xi32>
    %c0_i32_15 = arith.constant 0 : i32
    %34 = vector.broadcast %c0_i32_15 : i32 to vector<1x256xi32>
    %35 = arith.cmpi ne, %33, %34 : vector<1x256xi32>
    %c0_i32_16 = arith.constant 0 : i32
    %36 = vector.broadcast %c0_i32_16 : i32 to vector<1x256xi32>
    %37 = arith.cmpi slt, %33, %36 : vector<1x256xi32>
    %c0_i32_17 = arith.constant 0 : i32
    %38 = arith.cmpi slt, %31, %c0_i32_17 : i32
    %39 = vector.broadcast %38 : i1 to vector<1x256xi1>
    %40 = vector.broadcast %39 : vector<1x256xi1> to vector<1x256xi1>
    %41 = arith.xori %37, %40 : vector<1x256xi1>
    %42 = arith.andi %41, %35 : vector<1x256xi1>
    %43 = vector.broadcast %31 : i32 to vector<1x256xi32>
    %44 = arith.addi %33, %43 : vector<1x256xi32>
    %45 = arith.select %42, %44, %33 : vector<1x256xi1>, vector<1x256xi32>
    %c0_18 = arith.constant 0 : index
    %c0_19 = arith.constant 0 : index
    %c0_20 = arith.constant 0 : index
    %46 = vector.load %arg3[%c0_18, %c0_19, %c0_20] : memref<3x4x12xf32, #tpu.memory_space<vmem>>, vector<1x4x12xf32>
    %47 = vector.shape_cast %46 : vector<1x4x12xf32> to vector<4x12xf32>
    %48 = arith.truncf %47 : vector<4x12xf32> to vector<4x12xbf16>
    %cst_21 = arith.constant 0.000000e+00 : f32
    %49 = vector.broadcast %cst_21 : f32 to vector<12x1xf32>
    %50 = vector.extract_strided_slice %28 {offsets = [0, 0], sizes = [12, 255], strides = [1, 1]} : vector<12x256xf32> to vector<12x255xf32>
    %51 = tpu.concatenate %49, %50 in 1 : vector<12x1xf32>, vector<12x255xf32> -> vector<12x256xf32>
    %c1_i32_22 = arith.constant 1 : i32
    %52 = vector.broadcast %c1_i32_22 : i32 to vector<1x256xi32>
    %53 = arith.cmpi sge, %45, %52 : vector<1x256xi32>
    %cst_23 = arith.constant 0.000000e+00 : f32
    %54 = vector.shape_cast %53 : vector<1x256xi1> to vector<1x256xi1>
    %55 = vector.broadcast %54 : vector<1x256xi1> to vector<12x256xi1>
    %56 = vector.broadcast %cst_23 : f32 to vector<12x256xf32>
    %57 = arith.select %55, %51, %56 : vector<12x256xi1>, vector<12x256xf32>
    %58 = arith.truncf %57 : vector<12x256xf32> to vector<12x256xbf16>
    %cst_24 = arith.constant dense<0.000000e+00> : vector<4x256xf32>
    %59 = tpu.matmul %48, %58, %cst_24 {dimension_numbers = #tpu.dot_dimension_numbers<[1], [0], [0], [1], [0, 0, 1, 1], [], []>} : vector<4x12xbf16>, vector<12x256xbf16>, vector<4x256xf32> -> vector<4x256xf32>
    %c1_25 = arith.constant 1 : index
    %c0_26 = arith.constant 0 : index
    %c0_27 = arith.constant 0 : index
    %60 = vector.load %arg3[%c1_25, %c0_26, %c0_27] : memref<3x4x12xf32, #tpu.memory_space<vmem>>, vector<1x4x12xf32>
    %61 = vector.shape_cast %60 : vector<1x4x12xf32> to vector<4x12xf32>
    %62 = arith.truncf %61 : vector<4x12xf32> to vector<4x12xbf16>
    %63 = arith.truncf %28 : vector<12x256xf32> to vector<12x256xbf16>
    %cst_28 = arith.constant dense<0.000000e+00> : vector<4x256xf32>
    %64 = tpu.matmul %62, %63, %cst_28 {dimension_numbers = #tpu.dot_dimension_numbers<[1], [0], [0], [1], [0, 0, 1, 1], [], []>} : vector<4x12xbf16>, vector<12x256xbf16>, vector<4x256xf32> -> vector<4x256xf32>
    %65 = arith.addf %59, %64 : vector<4x256xf32>
    %c2 = arith.constant 2 : index
    %c0_29 = arith.constant 0 : index
    %c0_30 = arith.constant 0 : index
    %66 = vector.load %arg3[%c2, %c0_29, %c0_30] : memref<3x4x12xf32, #tpu.memory_space<vmem>>, vector<1x4x12xf32>
    %67 = vector.shape_cast %66 : vector<1x4x12xf32> to vector<4x12xf32>
    %68 = arith.truncf %67 : vector<4x12xf32> to vector<4x12xbf16>
    %69 = vector.extract_strided_slice %28 {offsets = [0, 1], sizes = [12, 255], strides = [1, 1]} : vector<12x256xf32> to vector<12x255xf32>
    %cst_31 = arith.constant 0.000000e+00 : f32
    %70 = vector.broadcast %cst_31 : f32 to vector<12x1xf32>
    %71 = tpu.concatenate %69, %70 in 1 : vector<12x255xf32>, vector<12x1xf32> -> vector<12x256xf32>
    %c15_i32 = arith.constant 15 : i32
    %72 = vector.broadcast %c15_i32 : i32 to vector<1x256xi32>
    %73 = arith.cmpi slt, %45, %72 : vector<1x256xi32>
    %cst_32 = arith.constant 0.000000e+00 : f32
    %74 = vector.shape_cast %73 : vector<1x256xi1> to vector<1x256xi1>
    %75 = vector.broadcast %74 : vector<1x256xi1> to vector<12x256xi1>
    %76 = vector.broadcast %cst_32 : f32 to vector<12x256xf32>
    %77 = arith.select %75, %71, %76 : vector<12x256xi1>, vector<12x256xf32>
    %78 = arith.truncf %77 : vector<12x256xf32> to vector<12x256xbf16>
    %cst_33 = arith.constant dense<0.000000e+00> : vector<4x256xf32>
    %79 = tpu.matmul %68, %78, %cst_33 {dimension_numbers = #tpu.dot_dimension_numbers<[1], [0], [0], [1], [0, 0, 1, 1], [], []>} : vector<4x12xbf16>, vector<12x256xbf16>, vector<4x256xf32> -> vector<4x256xf32>
    %80 = arith.addf %65, %79 : vector<4x256xf32>
    %c0_34 = arith.constant 0 : index
    %c0_35 = arith.constant 0 : index
    %c0_36 = arith.constant 0 : index
    %81 = vector.load %arg4[%c0_34, %c0_35, %c0_36] : memref<1x4x256xf32, #tpu.memory_space<vmem>>, vector<1x4x256xf32>
    %82 = vector.shape_cast %81 : vector<1x4x256xf32> to vector<4x256xf32>
    %83 = vector.shape_cast %80 : vector<4x256xf32> to vector<1x4x256xf32>
    tpu.vector_store %arg4[%c0_34, %c0_35, %c0_36], %83 {strides = array<i32>} : memref<1x4x256xf32, #tpu.memory_space<vmem>>, vector<1x4x256xf32>,
    %cst_37 = arith.constant dense<0.000000e+00> : vector<4xf32>
    %84 = vector.multi_reduction <add>, %80, %cst_37 [1] : vector<4x256xf32> to vector<4xf32>
    %85 = vector.shape_cast %84 : vector<4xf32> to vector<4x1xf32>
    %86 = arith.mulf %80, %80 : vector<4x256xf32>
    %cst_38 = arith.constant dense<0.000000e+00> : vector<4xf32>
    %87 = vector.multi_reduction <add>, %86, %cst_38 [1] : vector<4x256xf32> to vector<4xf32>
    %88 = vector.shape_cast %87 : vector<4xf32> to vector<4x1xf32>
    %89 = tpu.concatenate %85, %88 in 1 : vector<4x1xf32>, vector<4x1xf32> -> vector<4x2xf32>
    %c0_39 = arith.constant 0 : index
    %c0_40 = arith.constant 0 : index
    %c0_41 = arith.constant 0 : index
    %90 = vector.load %arg5[%c0_39, %c0_40, %c0_41] : memref<1x4x2xf32, #tpu.memory_space<vmem>>, vector<1x4x2xf32>
    %91 = vector.shape_cast %90 : vector<1x4x2xf32> to vector<4x2xf32>
    %92 = vector.shape_cast %89 : vector<4x2xf32> to vector<1x4x2xf32>
    tpu.vector_store %arg5[%c0_39, %c0_40, %c0_41], %92 {strides = array<i32>} : memref<1x4x2xf32, #tpu.memory_space<vmem>>, vector<1x4x2xf32>,
    return
  }
  func.func @transform_0(%arg0: i32) -> (i32, i32, i32) {
    %c0_i32 = arith.constant 0 : i32
    %c0_i32_0 = arith.constant 0 : i32
    %c0_i32_1 = arith.constant 0 : i32
    return %arg0, %c0_i32, %c0_i32_0 : i32, i32, i32
  }
  func.func @transform_1(%arg0: i32) -> (i32, i32, i32) {
    %c0_i32 = arith.constant 0 : i32
    %c0_i32_0 = arith.constant 0 : i32
    %c0_i32_1 = arith.constant 0 : i32
    %c0_i32_2 = arith.constant 0 : i32
    return %c0_i32, %c0_i32_0, %c0_i32_1 : i32, i32, i32
  }
  func.func @transform_2(%arg0: i32) -> (i32, i32, i32) {
    %c0_i32 = arith.constant 0 : i32
    %c0_i32_0 = arith.constant 0 : i32
    %c0_i32_1 = arith.constant 0 : i32
    %c0_i32_2 = arith.constant 0 : i32
    return %c0_i32, %c0_i32_0, %c0_i32_1 : i32, i32, i32
  }
  func.func @transform_3(%arg0: i32) -> (i32, i32, i32) {
    %c0_i32 = arith.constant 0 : i32
    %c0_i32_0 = arith.constant 0 : i32
    %c0_i32_1 = arith.constant 0 : i32
    return %arg0, %c0_i32, %c0_i32_0 : i32, i32, i32
  }
  func.func @transform_4(%arg0: i32) -> (i32, i32, i32) {
    %c0_i32 = arith.constant 0 : i32
    %c0_i32_0 = arith.constant 0 : i32
    %c0_i32_1 = arith.constant 0 : i32
    return %arg0, %c0_i32, %c0_i32_0 : i32, i32, i32
  }
}

module attributes {stable_mosaic.version = 11 : i64} {
  func.func @_bn_residual_relu_kernel(%arg0: i32, %arg1: i32, %arg2: memref<1x16x256xf32, #tpu.memory_space<vmem>>, %arg3: memref<1x16x256xf32, #tpu.memory_space<vmem>>, %arg4: memref<2x16x1xf32, #tpu.memory_space<vmem>>, %arg5: memref<1x16x256xf32, #tpu.memory_space<vmem>>) attributes {dimension_semantics = [#tpu.dimension_semantics<parallel>, #tpu.dimension_semantics<parallel>], iteration_bounds = array<i64: 2, 1>, scalar_prefetch = 0 : i64, scratch_operands = 0 : i64, tpu.core_type = #tpu.core_type<tc>, window_params = [{transform_indices = @transform_0, window_bounds = array<i64: 1, 16, 256>}, {transform_indices = @transform_1, window_bounds = array<i64: 1, 16, 256>}, {pipeline_mode = #tpu.pipeline_mode<synchronous>, transform_indices = @transform_2, window_bounds = array<i64: 2, 16, 1>}, {transform_indices = @transform_3, window_bounds = array<i64: 1, 16, 256>}]} {
    %c0 = arith.constant 0 : index
    %c0_0 = arith.constant 0 : index
    %c0_1 = arith.constant 0 : index
    %0 = vector.load %arg4[%c0, %c0_0, %c0_1] : memref<2x16x1xf32, #tpu.memory_space<vmem>>, vector<1x16x1xf32>
    %1 = vector.shape_cast %0 : vector<1x16x1xf32> to vector<16x1xf32>
    %c1 = arith.constant 1 : index
    %c0_2 = arith.constant 0 : index
    %c0_3 = arith.constant 0 : index
    %2 = vector.load %arg4[%c1, %c0_2, %c0_3] : memref<2x16x1xf32, #tpu.memory_space<vmem>>, vector<1x16x1xf32>
    %3 = vector.shape_cast %2 : vector<1x16x1xf32> to vector<16x1xf32>
    %c0_4 = arith.constant 0 : index
    %c0_5 = arith.constant 0 : index
    %c0_6 = arith.constant 0 : index
    %4 = vector.load %arg2[%c0_4, %c0_5, %c0_6] : memref<1x16x256xf32, #tpu.memory_space<vmem>>, vector<1x16x256xf32>
    %5 = vector.shape_cast %4 : vector<1x16x256xf32> to vector<16x256xf32>
    %6 = vector.broadcast %1 : vector<16x1xf32> to vector<16x256xf32>
    %7 = arith.mulf %5, %6 : vector<16x256xf32>
    %8 = vector.broadcast %3 : vector<16x1xf32> to vector<16x256xf32>
    %9 = arith.addf %7, %8 : vector<16x256xf32>
    %c0_7 = arith.constant 0 : index
    %c0_8 = arith.constant 0 : index
    %c0_9 = arith.constant 0 : index
    %10 = vector.load %arg3[%c0_7, %c0_8, %c0_9] : memref<1x16x256xf32, #tpu.memory_space<vmem>>, vector<1x16x256xf32>
    %11 = vector.shape_cast %10 : vector<1x16x256xf32> to vector<16x256xf32>
    %12 = arith.addf %9, %11 : vector<16x256xf32>
    %cst = arith.constant 0.000000e+00 : f32
    %13 = vector.broadcast %cst : f32 to vector<16x256xf32>
    %14 = arith.maximumf %12, %13 : vector<16x256xf32>
    %c0_10 = arith.constant 0 : index
    %c0_11 = arith.constant 0 : index
    %c0_12 = arith.constant 0 : index
    %15 = vector.load %arg5[%c0_10, %c0_11, %c0_12] : memref<1x16x256xf32, #tpu.memory_space<vmem>>, vector<1x16x256xf32>
    %16 = vector.shape_cast %15 : vector<1x16x256xf32> to vector<16x256xf32>
    %17 = vector.shape_cast %14 : vector<16x256xf32> to vector<1x16x256xf32>
    tpu.vector_store %arg5[%c0_10, %c0_11, %c0_12], %17 {strides = array<i32>} : memref<1x16x256xf32, #tpu.memory_space<vmem>>, vector<1x16x256xf32>,
    return
  }
  func.func @transform_0(%arg0: i32, %arg1: i32) -> (i32, i32, i32) {
    %c0_i32 = arith.constant 0 : i32
    %c0_i32_0 = arith.constant 0 : i32
    return %arg0, %c0_i32, %arg1 : i32, i32, i32
  }
  func.func @transform_1(%arg0: i32, %arg1: i32) -> (i32, i32, i32) {
    %c0_i32 = arith.constant 0 : i32
    %c0_i32_0 = arith.constant 0 : i32
    return %arg0, %c0_i32, %arg1 : i32, i32, i32
  }
  func.func @transform_2(%arg0: i32, %arg1: i32) -> (i32, i32, i32) {
    %c0_i32 = arith.constant 0 : i32
    %c0_i32_0 = arith.constant 0 : i32
    %c0_i32_1 = arith.constant 0 : i32
    %c0_i32_2 = arith.constant 0 : i32
    return %c0_i32, %c0_i32_0, %c0_i32_1 : i32, i32, i32
  }
  func.func @transform_3(%arg0: i32, %arg1: i32) -> (i32, i32, i32) {
    %c0_i32 = arith.constant 0 : i32
    %c0_i32_0 = arith.constant 0 : i32
    return %arg0, %c0_i32, %arg1 : i32, i32, i32
  }
}

</mosaic_0001>

<llo_original>
// kernel: bottleneck_pallas.4
$region0: #{bottleneck_pallas.4}
  #allocation0 [shape = 'u32[]', space=smem, size = 0x4, offset = 0x4, fixed_abs, tag = 'smem constant byte address 0x4 - core index']
  #allocation1 [shape = 'u32[72,128]{1,0:T(1,128)}', space=vmem, size = 0x9000, scoped, tag = 'internal scratch']
  %s0 = inlined_call_operand.vmem [shape: f32[2,16,256], index: 0, kind: input, shape index: {}]
  %s1 = inlined_call_operand.vmem [shape: f32[4,16], index: 1, kind: input, shape index: {}]
  %s2 = inlined_call_operand.vmem [shape: f32[2,4,256], index: 2, kind: output, shape index: {0}]
  %s3 = inlined_call_operand.vmem [shape: f32[2,1,4,2], index: 3, kind: output, shape index: {1}]
  %4 = xla_tuple %s2, %s3
  %s5 = sld [smem:[#allocation0]]
  $region49: #{bottleneck_pallas.4} parent=0
    _
  %s7 = ssub.s32 1, %s5
  %s8 = scalar_select 0, %s7, %s5
  loop: start=0, step=1, limit=4
  $region2: #{bottleneck_pallas.4} parent=0 // loop_pre_header
    _
  $region3: #{bottleneck_pallas.4} parent=0 // loop_header
    %s10 = sphi 0, %s14
    %p11 = scmp.ge.s32.totalorder %s10, 4
    %s17 = sphi 0, %s29
    %s18 = sphi 0, %s25
    %s19 = sphi 0, %s17
    %s20 = sphi 0, %s18
    %s21 = sphi 0, %s19
    %s22 = sphi 0, %s20
    %s34 = sphi 0, %s36
    %s37 = sphi 0, %s34
    %s38 = sphi 0, %s37
    %s54 = sphi 0, %s38
    %s58 = sphi 0, %s58
    %s60 = sphi 0, %s58
    %s61 = sphi 0, %s60
    %s75 = sphi 0, %s61
    %s83 = sphi 0, %s85
    %s86 = sphi 0, %s83
    %s87 = sphi 0, %s86
    %s103 = sphi 0, %s87
    %s111 = sphi 0, %s113
    %s114 = sphi 0, %s111
    %s115 = sphi 0, %s114
    %s131 = sphi 0, %s115
  $region4: #{bottleneck_pallas.4} parent=0 // loop_header_branch
    %13 = sbr.rel (%p11) target = $region8
  $region5: #{bottleneck_pallas.4} parent=0 // loop_body
    %s15 = ssub.s32 %s10, 1
    %s16 = ssub.s32 %s10, 2
    %s23 = sadd.s32 1, %s18
    %p24 = scmp.ge.s32.totalorder %s23, 1
    %s25 = scalar_select %p24, 0, %s23
    %s26 = sadd.s32 1, %s17
    %s27 = scalar_select %p24, %s26, %s17
    %p28 = scmp.ge.s32.totalorder %s27, 2
    %s29 = scalar_select %p28, 0, %s27
    %s30 = ssub.s32 %s17, %s29
    %s31 = ssub.s32 %s18, %s25
    %s32 = sor.u32 %s30, %s31
    %p33 = scmp.eq.s32.totalorder %s32, 0
    %s35 = sadd.s32 %s34, 1
    %s36 = scalar_select %p33, %s34, %s35
    %p39 = pneg %p33
    %p40 = scmp.eq.s32.totalorder %s10, 1
    %p41 = por %p39, %p40
    %p42 = scmp.ne.s32.totalorder %s34, %s37
    %p43 = scmp.eq.s32.totalorder %s10, 0
    %p44 = por %p42, %p43
    %p45 = scmp.ne.s32.totalorder %s34, %s37
    %p46 = scmp.eq.s32.totalorder %s15, 1
    %p47 = por %p45, %p46
    %p48 = scmp.ne.s32.totalorder %s37, %s38
    %p49 = scmp.eq.s32.totalorder %s15, 0
    %p50 = por %p48, %p49
    %p51 = scmp.ne.s32.totalorder %s37, %s38
    %p52 = scmp.eq.s32.totalorder %s16, 1
    %p53 = por %p51, %p52
    %p55 = scmp.ne.s32.totalorder %s38, %s54
    %p56 = scmp.eq.s32.totalorder %s16, 0
    %p57 = por %p55, %p56
    %s59 = sadd.s32 %s58, 1
    %p62 = scmp.eq.s32.totalorder %s10, 1
    %p63 = scmp.ne.s32.totalorder %s58, %s60
    %p64 = scmp.eq.s32.totalorder %s10, 0
    %p65 = por %p63, %p64
    %p66 = scmp.ne.s32.totalorder %s58, %s60
    %p67 = scmp.eq.s32.totalorder %s15, 1
    %p68 = por %p66, %p67
    %p69 = scmp.ne.s32.totalorder %s60, %s61
    %p70 = scmp.eq.s32.totalorder %s15, 0
    %p71 = por %p69, %p70
    %p72 = scmp.ne.s32.totalorder %s60, %s61
    %p73 = scmp.eq.s32.totalorder %s16, 1
    %p74 = por %p72, %p73
    %p76 = scmp.ne.s32.totalorder %s61, %s75
    %p77 = scmp.eq.s32.totalorder %s16, 0
    %p78 = por %p76, %p77
    %s79 = ssub.s32 %s17, %s29
    %s80 = ssub.s32 %s18, %s25
    %s81 = sor.u32 %s79, %s80
    %p82 = scmp.eq.s32.totalorder %s81, 0
    %s84 = sadd.s32 %s83, 1
    %s85 = scalar_select %p82, %s83, %s84
    %p88 = pneg %p82
    %p89 = scmp.eq.s32.totalorder %s10, 1
    %p90 = por %p88, %p89
    %p91 = scmp.ne.s32.totalorder %s83, %s86
    %p92 = scmp.eq.s32.totalorder %s10, 0
    %p93 = por %p91, %p92
    %p94 = scmp.ne.s32.totalorder %s83, %s86
    %p95 = scmp.eq.s32.totalorder %s15, 1
    %p96 = por %p94, %p95
    %p97 = scmp.ne.s32.totalorder %s86, %s87
    %p98 = scmp.eq.s32.totalorder %s15, 0
    %p99 = por %p97, %p98
    %p100 = scmp.ne.s32.totalorder %s86, %s87
    %p101 = scmp.eq.s32.totalorder %s16, 1
    %p102 = por %p100, %p101
    %p104 = scmp.ne.s32.totalorder %s87, %s103
    %p105 = scmp.eq.s32.totalorder %s16, 0
    %p106 = por %p104, %p105
    %s107 = ssub.s32 %s17, %s29
    %s108 = ssub.s32 %s18, %s25
    %s109 = sor.u32 %s107, %s108
    %p110 = scmp.eq.s32.totalorder %s109, 0
    %s112 = sadd.s32 %s111, 1
    %s113 = scalar_select %p110, %s111, %s112
    %p116 = pneg %p110
    %p117 = scmp.eq.s32.totalorder %s10, 1
    %p118 = por %p116, %p117
    %p119 = scmp.ne.s32.totalorder %s111, %s114
    %p120 = scmp.eq.s32.totalorder %s10, 0
    %p121 = por %p119, %p120
    %p122 = scmp.ne.s32.totalorder %s111, %s114
    %p123 = scmp.eq.s32.totalorder %s15, 1
    %p124 = por %p122, %p123
    %p125 = scmp.ne.s32.totalorder %s114, %s115
    %p126 = scmp.eq.s32.totalorder %s15, 0
    %p127 = por %p125, %p126
    %p128 = scmp.ne.s32.totalorder %s114, %s115
    %p129 = scmp.eq.s32.totalorder %s16, 1
    %p130 = por %p128, %p129
    %p132 = scmp.ne.s32.totalorder %s115, %s131
    %p133 = scmp.eq.s32.totalorder %s16, 0
    %p134 = por %p132, %p133
    %p135 = scmp.le.s32.totalorder 1, %s10
    %p136 = scmp.lt.s32.totalorder %s10, 3
    %p137 = pnand %p135, %p136
    %p138 = pneg %p137
    // Predicated region
    $region9: #{bottleneck_pallas.4} parent=5 // pred_check
      _
    $region10: #{bottleneck_pallas.4} parent=5 // pred_check_branch
      %140 = sbr.rel (%p137) target = $region12
    $region11: #{bottleneck_pallas.4} parent=5 // pred_region
      %s141 = ssub.s32 %s10, 1
      // Predicated region
      $region13: #{bottleneck_pallas.4} parent=11 // pred_check
        %p142 = pneg %p71
      $region14: #{bottleneck_pallas.4} parent=11 // pred_check_branch
        %144 = sbr.rel (%p142) target = $region16
      $region15: #{bottleneck_pallas.4} parent=11 // pred_region
        _
      $region16: #{bottleneck_pallas.4} parent=11 // pred_fallthru
        _
    $region12: #{bottleneck_pallas.4} parent=5 // pred_fallthru
      _
    %p145 = scmp.lt.s32.totalorder %s10, 2
    // Predicated region
    $region17: #{bottleneck_pallas.4} parent=5 // pred_check
      %p146 = pneg %p145
    $region18: #{bottleneck_pallas.4} parent=5 // pred_check_branch
      %148 = sbr.rel (%p146) target = $region20
    $region19: #{bottleneck_pallas.4} parent=5 // pred_region
      // Predicated region
      $region21: #{bottleneck_pallas.4} parent=19 // pred_check
        %p149 = pneg %p44
      $region22: #{bottleneck_pallas.4} parent=19 // pred_check_branch
        %151 = sbr.rel (%p149) target = $region24
      $region23: #{bottleneck_pallas.4} parent=19 // pred_region
        %s152 = smul.u32 2, %s18
        %p153 = scmp.lt.s32.totalorder %s17, 1
        %s154 = scalar_select %p153, %s17, 1
        %p155 = scmp.lt.s32.totalorder %s152, 1
        %s156 = scalar_select %p155, %s152, 1
        %s157 = smul.addr %s154, 4
        %s158 = sadd.s32 %s156, %s157
        %s159 = smul.addr %s158, 8
        %s160 = scalar_lea.vmem %s0, %s159
        %s161 = smul.u32 2, %s18
      $region24: #{bottleneck_pallas.4} parent=19 // pred_fallthru
        _
    $region20: #{bottleneck_pallas.4} parent=5 // pred_fallthru
      _
    %p162 = scmp.le.s32.totalorder 1, %s10
    %p163 = scmp.lt.s32.totalorder %s10, 3
    %p164 = pnand %p162, %p163
    %p165 = pneg %p164
    // Predicated region
    $region25: #{bottleneck_pallas.4} parent=5 // pred_check
      _
    $region26: #{bottleneck_pallas.4} parent=5 // pred_check_branch
      %167 = sbr.rel (%p164) target = $region28
    $region27: #{bottleneck_pallas.4} parent=5 // pred_region
      %s168 = ssub.s32 %s10, 1
      %s169 = smul.u32 2, %s20
      %p170 = scmp.lt.s32.totalorder %s19, 1
      %s171 = scalar_select %p170, %s19, 1
      %p172 = scmp.lt.s32.totalorder %s169, 1
      %s173 = scalar_select %p172, %s169, 1
      %s174 = smul.addr %s171, 4
      %s175 = sadd.s32 %s173, %s174
      %s176 = smul.addr %s175, 8
      %s177 = scalar_lea.vmem %s0, %s176
      %p178 = pneg %p50
      %p179 = pneg %p47
      %p180 = pneg %p71
      %p181 = pneg %p68
      %p182 = pneg %p99
      %p183 = pneg %p96
      %s184 = smul.u32 2, %s20
      %p185 = scmp.lt.s32.totalorder %s19, 1
      %s186 = scalar_select %p185, %s19, 1
      %p187 = scmp.lt.s32.totalorder %s184, 1
      %s188 = scalar_select %p187, %s184, 1
      %s189 = smul.addr %s186, 2
      %s190 = sadd.s32 %s188, %s189
      %s191 = smul.addr %s190, 4
      %s192 = scalar_lea.vmem %s2, %s191
      %p193 = pneg %p127
      %p194 = pneg %p124
      %p195 = scmp.lt.s32.totalorder %s19, 1
      %s196 = scalar_select %p195, %s19, 1
      %p197 = scmp.lt.s32.totalorder %s20, 0
      %s198 = scalar_select %p197, %s20, 0
      %s199 = sadd.s32 %s198, %s196
      %s200 = smul.addr %s199, 4
      %s201 = scalar_lea.vmem %s3, %s200
      %s202 = smul.u32 2, %s20
      %p203 = scmp.lt.s32.totalorder %s19, 1
      %s204 = scalar_select %p203, %s19, 1
      %p205 = scmp.lt.s32.totalorder %s202, 1
      %s206 = scalar_select %p205, %s202, 1
      %s207 = smul.addr %s204, 4
      %s208 = sadd.s32 %s206, %s207
      %s209 = smul.addr %s208, 8
      %s210 = scalar_lea.vmem %s0, %s209
      %s211 = smul.u32 2, %s20
      %s212 = smul.u32 2, %s20
      %p213 = scmp.lt.s32.totalorder %s19, 1
      %s214 = scalar_select %p213, %s19, 1
      %p215 = scmp.lt.s32.totalorder %s212, 1
      %s216 = scalar_select %p215, %s212, 1
      %s217 = smul.addr %s214, 2
      %s218 = sadd.s32 %s216, %s217
      %s219 = smul.addr %s218, 4
      %s220 = scalar_lea.vmem %s2, %s219
      %s221 = smul.u32 2, %s20
      %p222 = scmp.lt.s32.totalorder %s19, 1
      %s223 = scalar_select %p222, %s19, 1
      %p224 = scmp.lt.s32.totalorder %s20, 0
      %s225 = scalar_select %p224, %s20, 0
      %s226 = sadd.s32 %s225, %s223
      %s227 = smul.addr %s226, 4
      %s228 = scalar_lea.vmem %s3, %s227
      %v230 = vld [vmem:[%s210] sm:$0xff]
      %v231 = vld [vmem:[%s210 + $0x8] sm:$0xff]
      %v232 = vld [vmem:[%s210 + $0x10] sm:$0xff]
      %v233 = vld [vmem:[%s210 + $0x18] sm:$0xff]
      %v234 = vld [vmem:[%s1] sm:$0xf]
      %v235 = vpack.c.bf16 %v234, %v234
      %v236 = vpack.c.bf16 %v232, %v230
      %v237 = vpack.c.bf16 %v233, %v231
      %vm238 = vcmask 130048
      %v240 = vsel %vm238, %v235, 0
      %242 = vmatpush.bf16.msra.mxu0 0
      %243 = vmatpush.bf16.msra.mxu0 0
      %244 = vmatpush.bf16.msra.mxu0 0
      %245 = vmatpush.bf16.msra.mxu0 0
      %246 = vmatpush.bf16.msra.mxu0 0
      %247 = vmatpush.bf16.msra.mxu0 0
      %248 = vmatpush.bf16.msra.mxu0 0
      %249 = vmatpush.bf16.msra.mxu0 %v236
      %250 = vmatmul.bf16.gmra.mxu0 %v240
      %v251 = vpop.f32.mrf.mxu0
      %v252 = vadd.f32 0.0, %v251
      %v253 = vpop.f32.mrf.mxu0
      %254 = vdwg.mxu0
      %255 = vmatpush.bf16.msra.mxu0 0
      %256 = vmatpush.bf16.msra.mxu0 0
      %257 = vmatpush.bf16.msra.mxu0 0
      %258 = vmatpush.bf16.msra.mxu0 0
      %259 = vmatpush.bf16.msra.mxu0 0
      %260 = vmatpush.bf16.msra.mxu0 0
      %261 = vmatpush.bf16.msra.mxu0 0
      %262 = vmatpush.bf16.msra.mxu0 %v237
      %263 = vmatmul.bf16.gmra.mxu0 %v240
      %v264 = vpop.f32.mrf.mxu0
      %v265 = vadd.f32 0.0, %v264
      %v266 = vpop.f32.mrf.mxu0
      %267 = vdwg.mxu0
      %v270 = vrot.slane %v265, 4
      %vm271 = vcmask 1043456
      %v272 = vsel %vm271, %v252, %v270
      %274 = vst [vmem:[%s220] sm:$0xff] %v272
      %v275 = vsel %vm271, %v252, 0.0
      %v276 = vsel %vm271, %v265, 0.0
      %v277 = vadd.f32 %v275, %v276
      %278 = vadd.xlane.f32.xlu0 %v277
      %v279 = vpop.xlane.xlu0 %278
      %v280 = vmul.f32 %v252, %v252
      %v281 = vmul.f32 %v265, %v265
      %v282 = vsel %vm271, %v280, 0.0
      %v283 = vsel %vm271, %v281, 0.0
      %v284 = vadd.f32 %v282, %v283
      %285 = vadd.xlane.f32.xlu0 %v284
      %v286 = vpop.xlane.xlu0 %285
      %vm287 = vcmask 7168
      %v288 = vsel %vm287, %v279, %v286
      %vm289 = vcmask 11264
      %290 = vst.msk [vmem:[%s228] sm:$0xf] %vm289, %v288
      %s291 = smul.u32 2, %s20
      %p292 = scmp.lt.s32.totalorder %s19, 1
      %s293 = scalar_select %p292, %s19, 1
      %p294 = scmp.lt.s32.totalorder %s291, 1
      %s295 = scalar_select %p294, %s291, 1
      %s296 = smul.addr %s293, 2
      %s297 = sadd.s32 %s295, %s296
      %s298 = smul.addr %s297, 4
      %s299 = scalar_lea.vmem %s2, %s298
      %p300 = scmp.lt.s32.totalorder %s19, 1
      %s301 = scalar_select %p300, %s19, 1
      %p302 = scmp.lt.s32.totalorder %s20, 0
      %s303 = scalar_select %p302, %s20, 0
      %s304 = sadd.s32 %s303, %s301
      %s305 = smul.addr %s304, 4
      %s306 = scalar_lea.vmem %s3, %s305
      // Predicated region
      $region29: #{bottleneck_pallas.4} parent=27 // pred_check
        %p307 = pneg %p96
      $region30: #{bottleneck_pallas.4} parent=27 // pred_check_branch
        %309 = sbr.rel (%p307) target = $region32
      $region31: #{bottleneck_pallas.4} parent=27 // pred_region
        %s310 = smul.u32 2, %s20
      $region32: #{bottleneck_pallas.4} parent=27 // pred_fallthru
        _
      // Predicated region
      $region33: #{bottleneck_pallas.4} parent=27 // pred_check
        %p311 = pneg %p124
      $region34: #{bottleneck_pallas.4} parent=27 // pred_check_branch
        %313 = sbr.rel (%p311) target = $region36
      $region35: #{bottleneck_pallas.4} parent=27 // pred_region
        _
      $region36: #{bottleneck_pallas.4} parent=27 // pred_fallthru
        _
    $region28: #{bottleneck_pallas.4} parent=5 // pred_fallthru
      _
    %p314 = scmp.le.s32.totalorder 2, %s10
    // Predicated region
    $region37: #{bottleneck_pallas.4} parent=5 // pred_check
      %p315 = pneg %p314
    $region38: #{bottleneck_pallas.4} parent=5 // pred_check_branch
      %317 = sbr.rel (%p315) target = $region40
    $region39: #{bottleneck_pallas.4} parent=5 // pred_region
      %s318 = ssub.s32 %s10, 2
      // Predicated region
      $region41: #{bottleneck_pallas.4} parent=39 // pred_check
        %p319 = pneg %p102
      $region42: #{bottleneck_pallas.4} parent=39 // pred_check_branch
        %321 = sbr.rel (%p319) target = $region44
      $region43: #{bottleneck_pallas.4} parent=39 // pred_region
        %s322 = smul.u32 2, %s22
        %p323 = scmp.lt.s32.totalorder %s21, 1
        %s324 = scalar_select %p323, %s21, 1
        %p325 = scmp.lt.s32.totalorder %s322, 1
        %s326 = scalar_select %p325, %s322, 1
        %s327 = smul.addr %s324, 2
        %s328 = sadd.s32 %s326, %s327
        %s329 = smul.addr %s328, 4
        %s330 = scalar_lea.vmem %s2, %s329
      $region44: #{bottleneck_pallas.4} parent=39 // pred_fallthru
        _
      // Predicated region
      $region45: #{bottleneck_pallas.4} parent=39 // pred_check
        %p331 = pneg %p130
      $region46: #{bottleneck_pallas.4} parent=39 // pred_check_branch
        %333 = sbr.rel (%p331) target = $region48
      $region47: #{bottleneck_pallas.4} parent=39 // pred_region
        %p334 = scmp.lt.s32.totalorder %s21, 1
        %s335 = scalar_select %p334, %s21, 1
        %p336 = scmp.lt.s32.totalorder %s22, 0
        %s337 = scalar_select %p336, %s22, 0
        %s338 = sadd.s32 %s337, %s335
        %s339 = smul.addr %s338, 4
        %s340 = scalar_lea.vmem %s3, %s339
      $region48: #{bottleneck_pallas.4} parent=39 // pred_fallthru
        _
    $region40: #{bottleneck_pallas.4} parent=5 // pred_fallthru
      _
  $region6: #{bottleneck_pallas.4} parent=0 // loop_footer
    %s14 = sadd.s32 1, %s10
  $region7: #{bottleneck_pallas.4} parent=0 // loop_footer_branch
    %9 = sbr.rel target = $region3
  $region8: #{bottleneck_pallas.4} parent=0 // loop_exit
    _

// kernel: bottleneck_pallas.6
$region0: #{bottleneck_pallas.6}
  #allocation0 [shape = 'u32[]', space=smem, size = 0x4, offset = 0x4, fixed_abs, tag = 'smem constant byte address 0x4 - core index']
  #allocation1 [shape = 'u32[72,128]{1,0:T(1,128)}', space=vmem, size = 0x9000, scoped, tag = 'internal scratch']
  %s0 = inlined_call_operand.vmem [shape: f32[2,4,256], index: 0, kind: input, shape index: {}]
  %s1 = inlined_call_operand.vmem [shape: f32[2,4,1], index: 1, kind: input, shape index: {}]
  %s2 = inlined_call_operand.vmem [shape: f32[16,4], index: 2, kind: input, shape index: {}]
  %s3 = inlined_call_operand.vmem [shape: f32[2,16,256], index: 3, kind: output, shape index: {0}]
  %s4 = inlined_call_operand.vmem [shape: f32[2,1,16,2], index: 4, kind: output, shape index: {1}]
  %5 = xla_tuple %s3, %s4
  %s6 = sld [smem:[#allocation0]]
  $region53: #{bottleneck_pallas.6} parent=0
    _
  %s8 = ssub.s32 1, %s6
  %s9 = scalar_select 0, %s8, %s6
  loop: start=0, step=1, limit=4
  $region2: #{bottleneck_pallas.6} parent=0 // loop_pre_header
    _
  $region3: #{bottleneck_pallas.6} parent=0 // loop_header
    %s11 = sphi 0, %s15
    %p12 = scmp.ge.s32.totalorder %s11, 4
    %s18 = sphi 0, %s30
    %s19 = sphi 0, %s26
    %s20 = sphi 0, %s18
    %s21 = sphi 0, %s19
    %s22 = sphi 0, %s20
    %s23 = sphi 0, %s21
    %s35 = sphi 0, %s37
    %s38 = sphi 0, %s35
    %s39 = sphi 0, %s38
    %s55 = sphi 0, %s39
    %s59 = sphi 0, %s59
    %s61 = sphi 0, %s59
    %s62 = sphi 0, %s61
    %s76 = sphi 0, %s62
    %s80 = sphi 0, %s80
    %s82 = sphi 0, %s80
    %s83 = sphi 0, %s82
    %s97 = sphi 0, %s83
    %s105 = sphi 0, %s107
    %s108 = sphi 0, %s105
    %s109 = sphi 0, %s108
    %s125 = sphi 0, %s109
    %s133 = sphi 0, %s135
    %s136 = sphi 0, %s133
    %s137 = sphi 0, %s136
    %s153 = sphi 0, %s137
  $region4: #{bottleneck_pallas.6} parent=0 // loop_header_branch
    %14 = sbr.rel (%p12) target = $region8
  $region5: #{bottleneck_pallas.6} parent=0 // loop_body
    %s16 = ssub.s32 %s11, 1
    %s17 = ssub.s32 %s11, 2
    %s24 = sadd.s32 1, %s19
    %p25 = scmp.ge.s32.totalorder %s24, 1
    %s26 = scalar_select %p25, 0, %s24
    %s27 = sadd.s32 1, %s18
    %s28 = scalar_select %p25, %s27, %s18
    %p29 = scmp.ge.s32.totalorder %s28, 2
    %s30 = scalar_select %p29, 0, %s28
    %s31 = ssub.s32 %s18, %s30
    %s32 = ssub.s32 %s19, %s26
    %s33 = sor.u32 %s31, %s32
    %p34 = scmp.eq.s32.totalorder %s33, 0
    %s36 = sadd.s32 %s35, 1
    %s37 = scalar_select %p34, %s35, %s36
    %p40 = pneg %p34
    %p41 = scmp.eq.s32.totalorder %s11, 1
    %p42 = por %p40, %p41
    %p43 = scmp.ne.s32.totalorder %s35, %s38
    %p44 = scmp.eq.s32.totalorder %s11, 0
    %p45 = por %p43, %p44
    %p46 = scmp.ne.s32.totalorder %s35, %s38
    %p47 = scmp.eq.s32.totalorder %s16, 1
    %p48 = por %p46, %p47
    %p49 = scmp.ne.s32.totalorder %s38, %s39
    %p50 = scmp.eq.s32.totalorder %s16, 0
    %p51 = por %p49, %p50
    %p52 = scmp.ne.s32.totalorder %s38, %s39
    %p53 = scmp.eq.s32.totalorder %s17, 1
    %p54 = por %p52, %p53
    %p56 = scmp.ne.s32.totalorder %s39, %s55
    %p57 = scmp.eq.s32.totalorder %s17, 0
    %p58 = por %p56, %p57
    %s60 = sadd.s32 %s59, 1
    %p63 = scmp.eq.s32.totalorder %s11, 1
    %p64 = scmp.ne.s32.totalorder %s59, %s61
    %p65 = scmp.eq.s32.totalorder %s11, 0
    %p66 = por %p64, %p65
    %p67 = scmp.ne.s32.totalorder %s59, %s61
    %p68 = scmp.eq.s32.totalorder %s16, 1
    %p69 = por %p67, %p68
    %p70 = scmp.ne.s32.totalorder %s61, %s62
    %p71 = scmp.eq.s32.totalorder %s16, 0
    %p72 = por %p70, %p71
    %p73 = scmp.ne.s32.totalorder %s61, %s62
    %p74 = scmp.eq.s32.totalorder %s17, 1
    %p75 = por %p73, %p74
    %p77 = scmp.ne.s32.totalorder %s62, %s76
    %p78 = scmp.eq.s32.totalorder %s17, 0
    %p79 = por %p77, %p78
    %s81 = sadd.s32 %s80, 1
    %p84 = scmp.eq.s32.totalorder %s11, 1
    %p85 = scmp.ne.s32.totalorder %s80, %s82
    %p86 = scmp.eq.s32.totalorder %s11, 0
    %p87 = por %p85, %p86
    %p88 = scmp.ne.s32.totalorder %s80, %s82
    %p89 = scmp.eq.s32.totalorder %s16, 1
    %p90 = por %p88, %p89
    %p91 = scmp.ne.s32.totalorder %s82, %s83
    %p92 = scmp.eq.s32.totalorder %s16, 0
    %p93 = por %p91, %p92
    %p94 = scmp.ne.s32.totalorder %s82, %s83
    %p95 = scmp.eq.s32.totalorder %s17, 1
    %p96 = por %p94, %p95
    %p98 = scmp.ne.s32.totalorder %s83, %s97
    %p99 = scmp.eq.s32.totalorder %s17, 0
    %p100 = por %p98, %p99
    %s101 = ssub.s32 %s18, %s30
    %s102 = ssub.s32 %s19, %s26
    %s103 = sor.u32 %s101, %s102
    %p104 = scmp.eq.s32.totalorder %s103, 0
    %s106 = sadd.s32 %s105, 1
    %s107 = scalar_select %p104, %s105, %s106
    %p110 = pneg %p104
    %p111 = scmp.eq.s32.totalorder %s11, 1
    %p112 = por %p110, %p111
    %p113 = scmp.ne.s32.totalorder %s105, %s108
    %p114 = scmp.eq.s32.totalorder %s11, 0
    %p115 = por %p113, %p114
    %p116 = scmp.ne.s32.totalorder %s105, %s108
    %p117 = scmp.eq.s32.totalorder %s16, 1
    %p118 = por %p116, %p117
    %p119 = scmp.ne.s32.totalorder %s108, %s109
    %p120 = scmp.eq.s32.totalorder %s16, 0
    %p121 = por %p119, %p120
    %p122 = scmp.ne.s32.totalorder %s108, %s109
    %p123 = scmp.eq.s32.totalorder %s17, 1
    %p124 = por %p122, %p123
    %p126 = scmp.ne.s32.totalorder %s109, %s125
    %p127 = scmp.eq.s32.totalorder %s17, 0
    %p128 = por %p126, %p127
    %s129 = ssub.s32 %s18, %s30
    %s130 = ssub.s32 %s19, %s26
    %s131 = sor.u32 %s129, %s130
    %p132 = scmp.eq.s32.totalorder %s131, 0
    %s134 = sadd.s32 %s133, 1
    %s135 = scalar_select %p132, %s133, %s134
    %p138 = pneg %p132
    %p139 = scmp.eq.s32.totalorder %s11, 1
    %p140 = por %p138, %p139
    %p141 = scmp.ne.s32.totalorder %s133, %s136
    %p142 = scmp.eq.s32.totalorder %s11, 0
    %p143 = por %p141, %p142
    %p144 = scmp.ne.s32.totalorder %s133, %s136
    %p145 = scmp.eq.s32.totalorder %s16, 1
    %p146 = por %p144, %p145
    %p147 = scmp.ne.s32.totalorder %s136, %s137
    %p148 = scmp.eq.s32.totalorder %s16, 0
    %p149 = por %p147, %p148
    %p150 = scmp.ne.s32.totalorder %s136, %s137
    %p151 = scmp.eq.s32.totalorder %s17, 1
    %p152 = por %p150, %p151
    %p154 = scmp.ne.s32.totalorder %s137, %s153
    %p155 = scmp.eq.s32.totalorder %s17, 0
    %p156 = por %p154, %p155
    %p157 = scmp.le.s32.totalorder 1, %s11
    %p158 = scmp.lt.s32.totalorder %s11, 3
    %p159 = pnand %p157, %p158
    %p160 = pneg %p159
    // Predicated region
    $region9: #{bottleneck_pallas.6} parent=5 // pred_check
      _
    $region10: #{bottleneck_pallas.6} parent=5 // pred_check_branch
      %162 = sbr.rel (%p159) target = $region12
    $region11: #{bottleneck_pallas.6} parent=5 // pred_region
      %s163 = ssub.s32 %s11, 1
      // Predicated region
      $region13: #{bottleneck_pallas.6} parent=11 // pred_check
        %p164 = pneg %p72
      $region14: #{bottleneck_pallas.6} parent=11 // pred_check_branch
        %166 = sbr.rel (%p164) target = $region16
      $region15: #{bottleneck_pallas.6} parent=11 // pred_region
        _
      $region16: #{bottleneck_pallas.6} parent=11 // pred_fallthru
        _
      // Predicated region
      $region17: #{bottleneck_pallas.6} parent=11 // pred_check
        %p167 = pneg %p93
      $region18: #{bottleneck_pallas.6} parent=11 // pred_check_branch
        %169 = sbr.rel (%p167) target = $region20
      $region19: #{bottleneck_pallas.6} parent=11 // pred_region
        _
      $region20: #{bottleneck_pallas.6} parent=11 // pred_fallthru
        _
    $region12: #{bottleneck_pallas.6} parent=5 // pred_fallthru
      _
    %p170 = scmp.lt.s32.totalorder %s11, 2
    // Predicated region
    $region21: #{bottleneck_pallas.6} parent=5 // pred_check
      %p171 = pneg %p170
    $region22: #{bottleneck_pallas.6} parent=5 // pred_check_branch
      %173 = sbr.rel (%p171) target = $region24
    $region23: #{bottleneck_pallas.6} parent=5 // pred_region
      // Predicated region
      $region25: #{bottleneck_pallas.6} parent=23 // pred_check
        %p174 = pneg %p45
      $region26: #{bottleneck_pallas.6} parent=23 // pred_check_branch
        %176 = sbr.rel (%p174) target = $region28
      $region27: #{bottleneck_pallas.6} parent=23 // pred_region
        %s177 = smul.u32 2, %s19
        %p178 = scmp.lt.s32.totalorder %s18, 1
        %s179 = scalar_select %p178, %s18, 1
        %p180 = scmp.lt.s32.totalorder %s177, 1
        %s181 = scalar_select %p180, %s177, 1
        %s182 = smul.addr %s179, 2
        %s183 = sadd.s32 %s181, %s182
        %s184 = smul.addr %s183, 4
        %s185 = scalar_lea.vmem %s0, %s184
        %s186 = smul.u32 2, %s19
      $region28: #{bottleneck_pallas.6} parent=23 // pred_fallthru
        _
    $region24: #{bottleneck_pallas.6} parent=5 // pred_fallthru
      _
    %p187 = scmp.le.s32.totalorder 1, %s11
    %p188 = scmp.lt.s32.totalorder %s11, 3
    %p189 = pnand %p187, %p188
    %p190 = pneg %p189
    // Predicated region
    $region29: #{bottleneck_pallas.6} parent=5 // pred_check
      _
    $region30: #{bottleneck_pallas.6} parent=5 // pred_check_branch
      %192 = sbr.rel (%p189) target = $region32
    $region31: #{bottleneck_pallas.6} parent=5 // pred_region
      %s193 = ssub.s32 %s11, 1
      %s194 = smul.u32 2, %s21
      %p195 = scmp.lt.s32.totalorder %s20, 1
      %s196 = scalar_select %p195, %s20, 1
      %p197 = scmp.lt.s32.totalorder %s194, 1
      %s198 = scalar_select %p197, %s194, 1
      %s199 = smul.addr %s196, 2
      %s200 = sadd.s32 %s198, %s199
      %s201 = smul.addr %s200, 4
      %s202 = scalar_lea.vmem %s0, %s201
      %p203 = pneg %p51
      %p204 = pneg %p48
      %p205 = pneg %p72
      %p206 = pneg %p69
      %p207 = pneg %p93
      %p208 = pneg %p90
      %p209 = pneg %p121
      %p210 = pneg %p118
      %s211 = smul.u32 2, %s21
      %p212 = scmp.lt.s32.totalorder %s20, 1
      %s213 = scalar_select %p212, %s20, 1
      %p214 = scmp.lt.s32.totalorder %s211, 1
      %s215 = scalar_select %p214, %s211, 1
      %s216 = smul.addr %s213, 4
      %s217 = sadd.s32 %s215, %s216
      %s218 = smul.addr %s217, 8
      %s219 = scalar_lea.vmem %s3, %s218
      %p220 = pneg %p149
      %p221 = pneg %p146
      %p222 = scmp.lt.s32.totalorder %s20, 1
      %s223 = scalar_select %p222, %s20, 1
      %p224 = scmp.lt.s32.totalorder %s21, 0
      %s225 = scalar_select %p224, %s21, 0
      %s226 = smul.addr %s225, 2
      %s227 = smul.addr %s223, 2
      %s228 = sadd.s32 %s226, %s227
      %s229 = smul.addr %s228, 8
      %s230 = scalar_lea.vmem %s4, %s229
      %s231 = smul.u32 2, %s21
      %p232 = scmp.lt.s32.totalorder %s20, 1
      %s233 = scalar_select %p232, %s20, 1
      %p234 = scmp.lt.s32.totalorder %s231, 1
      %s235 = scalar_select %p234, %s231, 1
      %s236 = smul.addr %s233, 2
      %s237 = sadd.s32 %s235, %s236
      %s238 = smul.addr %s237, 4
      %s239 = scalar_lea.vmem %s0, %s238
      %s240 = smul.u32 2, %s21
      %s241 = smul.u32 2, %s21
      %p242 = scmp.lt.s32.totalorder %s20, 1
      %s243 = scalar_select %p242, %s20, 1
      %p244 = scmp.lt.s32.totalorder %s241, 1
      %s245 = scalar_select %p244, %s241, 1
      %s246 = smul.addr %s243, 4
      %s247 = sadd.s32 %s245, %s246
      %s248 = smul.addr %s247, 8
      %s249 = scalar_lea.vmem %s3, %s248
      %s250 = smul.u32 2, %s21
      %p251 = scmp.lt.s32.totalorder %s20, 1
      %s252 = scalar_select %p251, %s20, 1
      %p253 = scmp.lt.s32.totalorder %s21, 0
      %s254 = scalar_select %p253, %s21, 0
      %s255 = smul.addr %s254, 2
      %s256 = smul.addr %s252, 2
      %s257 = sadd.s32 %s255, %s256
      %s258 = smul.addr %s257, 8
      %s259 = scalar_lea.vmem %s4, %s258
      %v261 = vld [vmem:[%s239] sm:$0xff]
      %v262 = vld [vmem:[%s1] sm:$0xf]
      %s263 = scalar_lea.vmem %s1, 4
      %v264 = vld [vmem:[%s263] sm:$0xf]
      %266 = vset.pattern.permute.xlu0 0
      %267 = vperm.xlu0 %266, %v262
      %v268 = vpop.permute.xlu0 %267
      %v270 = vunpack.c.l.s4 839922192
      %v271 = vunpack.c.0.s8 %v270
      %v272 = vperm.slane %v268, %v271
      %v274 = vmul.f32 %v261, %v272
      %276 = vset.pattern.permute.xlu0 0
      %277 = vperm.xlu0 %276, %v264
      %v278 = vpop.permute.xlu0 %277
      %v280 = vunpack.c.l.s4 839922192
      %v281 = vunpack.c.0.s8 %v280
      %v282 = vperm.slane %v278, %v281
      %v284 = vadd.f32 %v274, %v282
      %v285 = vmax.f32 %v284, 0.0
      %v286 = vld [vmem:[%s2] sm:$0xff]
      %v287 = vld [vmem:[%s2 + $0x8] sm:$0xff]
      %v288 = vpack.c.bf16 %v287, %v286
      %290 = vst [vmem:[#allocation1] ss:$2 sm:$0xff] %v285
      %v291 = vld.sshfl [vmem:[#allocation1] sm:$0xff pattern:$0x75316420]
      %v292 = vld.sshfl [vmem:[#allocation1 + $0x8] sm:$0xff pattern:$0x75316420]
      %v295 = vpack.c.bf16 %v291, %v291
      %v296 = vpack.c.bf16 %v292, %v292
      %vm297 = vcmask 31744
      %v299 = vsel %vm297, %v288, 0
      %vm301 = vcmask 1041408
      %v303 = vsel %vm301, %v295, 0
      %v306 = vsel %vm301, %v296, 0
      %308 = vmatpush.bf16.msra.mxu0 0
      %309 = vmatpush.bf16.msra.mxu0 0
      %310 = vmatpush.bf16.msra.mxu0 0
      %311 = vmatpush.bf16.msra.mxu0 0
      %312 = vmatpush.bf16.msra.mxu0 0
      %313 = vmatpush.bf16.msra.mxu0 0
      %314 = vmatpush.bf16.msra.mxu0 0
      %315 = vmatpush.bf16.msra.mxu0 %v303
      %316 = vmatmul.bf16.gmra.mxu0 %v299
      %v317 = vpop.f32.mrf.mxu0
      %v318 = vadd.f32 0.0, %v317
      %v319 = vpop.f32.mrf.mxu0
      %v320 = vadd.f32 0.0, %v319
      %321 = vdwg.mxu0
      %322 = vmatpush.bf16.msra.mxu0 0
      %323 = vmatpush.bf16.msra.mxu0 0
      %324 = vmatpush.bf16.msra.mxu0 0
      %325 = vmatpush.bf16.msra.mxu0 0
      %326 = vmatpush.bf16.msra.mxu0 0
      %327 = vmatpush.bf16.msra.mxu0 0
      %328 = vmatpush.bf16.msra.mxu0 0
      %329 = vmatpush.bf16.msra.mxu0 %v306
      %330 = vmatmul.bf16.gmra.mxu0 %v299
      %v331 = vpop.f32.mrf.mxu0
      %v332 = vadd.f32 0.0, %v331
      %v333 = vpop.f32.mrf.mxu0
      %v334 = vadd.f32 0.0, %v333
      %335 = vdwg.mxu0
      %336 = vst [vmem:[%s249] sm:$0xff] %v318
      %337 = vst [vmem:[%s249 + $0x8] sm:$0xff] %v332
      %338 = vst [vmem:[%s249 + $0x10] sm:$0xff] %v320
      %339 = vst [vmem:[%s249 + $0x18] sm:$0xff] %v334
      %v340 = vadd.f32 %v318, %v332
      %341 = vadd.xlane.f32.xlu0 %v340
      %v342 = vpop.xlane.xlu0 %341
      %v343 = vadd.f32 %v320, %v334
      %344 = vadd.xlane.f32.xlu0 %v343
      %v345 = vpop.xlane.xlu0 %344
      %v346 = vmul.f32 %v318, %v318
      %v347 = vmul.f32 %v332, %v332
      %v348 = vmul.f32 %v320, %v320
      %v349 = vmul.f32 %v334, %v334
      %v350 = vadd.f32 %v346, %v347
      %351 = vadd.xlane.f32.xlu0 %v350
      %v352 = vpop.xlane.xlu0 %351
      %v353 = vadd.f32 %v348, %v349
      %354 = vadd.xlane.f32.xlu0 %v353
      %v355 = vpop.xlane.xlu0 %354
      %vm356 = vcmask 7168
      %v357 = vsel %vm356, %v342, %v352
      %v358 = vsel %vm356, %v345, %v355
      %vm359 = vcmask 15360
      %360 = vst.msk [vmem:[%s259] sm:$0xff] %vm359, %v357
      %361 = vst.msk [vmem:[%s259 + $0x8] sm:$0xff] %vm359, %v358
      %s362 = smul.u32 2, %s21
      %p363 = scmp.lt.s32.totalorder %s20, 1
      %s364 = scalar_select %p363, %s20, 1
      %p365 = scmp.lt.s32.totalorder %s362, 1
      %s366 = scalar_select %p365, %s362, 1
      %s367 = smul.addr %s364, 4
      %s368 = sadd.s32 %s366, %s367
      %s369 = smul.addr %s368, 8
      %s370 = scalar_lea.vmem %s3, %s369
      %p371 = scmp.lt.s32.totalorder %s20, 1
      %s372 = scalar_select %p371, %s20, 1
      %p373 = scmp.lt.s32.totalorder %s21, 0
      %s374 = scalar_select %p373, %s21, 0
      %s375 = smul.addr %s374, 2
      %s376 = smul.addr %s372, 2
      %s377 = sadd.s32 %s375, %s376
      %s378 = smul.addr %s377, 8
      %s379 = scalar_lea.vmem %s4, %s378
      // Predicated region
      $region33: #{bottleneck_pallas.6} parent=31 // pred_check
        %p380 = pneg %p118
      $region34: #{bottleneck_pallas.6} parent=31 // pred_check_branch
        %382 = sbr.rel (%p380) target = $region36
      $region35: #{bottleneck_pallas.6} parent=31 // pred_region
        %s383 = smul.u32 2, %s21
      $region36: #{bottleneck_pallas.6} parent=31 // pred_fallthru
        _
      // Predicated region
      $region37: #{bottleneck_pallas.6} parent=31 // pred_check
        %p384 = pneg %p146
      $region38: #{bottleneck_pallas.6} parent=31 // pred_check_branch
        %386 = sbr.rel (%p384) target = $region40
      $region39: #{bottleneck_pallas.6} parent=31 // pred_region
        _
      $region40: #{bottleneck_pallas.6} parent=31 // pred_fallthru
        _
    $region32: #{bottleneck_pallas.6} parent=5 // pred_fallthru
      _
    %p387 = scmp.le.s32.totalorder 2, %s11
    // Predicated region
    $region41: #{bottleneck_pallas.6} parent=5 // pred_check
      %p388 = pneg %p387
    $region42: #{bottleneck_pallas.6} parent=5 // pred_check_branch
      %390 = sbr.rel (%p388) target = $region44
    $region43: #{bottleneck_pallas.6} parent=5 // pred_region
      %s391 = ssub.s32 %s11, 2
      // Predicated region
      $region45: #{bottleneck_pallas.6} parent=43 // pred_check
        %p392 = pneg %p124
      $region46: #{bottleneck_pallas.6} parent=43 // pred_check_branch
        %394 = sbr.rel (%p392) target = $region48
      $region47: #{bottleneck_pallas.6} parent=43 // pred_region
        %s395 = smul.u32 2, %s23
        %p396 = scmp.lt.s32.totalorder %s22, 1
        %s397 = scalar_select %p396, %s22, 1
        %p398 = scmp.lt.s32.totalorder %s395, 1
        %s399 = scalar_select %p398, %s395, 1
        %s400 = smul.addr %s397, 4
        %s401 = sadd.s32 %s399, %s400
        %s402 = smul.addr %s401, 8
        %s403 = scalar_lea.vmem %s3, %s402
      $region48: #{bottleneck_pallas.6} parent=43 // pred_fallthru
        _
      // Predicated region
      $region49: #{bottleneck_pallas.6} parent=43 // pred_check
        %p404 = pneg %p152
      $region50: #{bottleneck_pallas.6} parent=43 // pred_check_branch
        %406 = sbr.rel (%p404) target = $region52
      $region51: #{bottleneck_pallas.6} parent=43 // pred_region
        %p407 = scmp.lt.s32.totalorder %s22, 1
        %s408 = scalar_select %p407, %s22, 1
        %p409 = scmp.lt.s32.totalorder %s23, 0
        %s410 = scalar_select %p409, %s23, 0
        %s411 = smul.addr %s410, 2
        %s412 = smul.addr %s408, 2
        %s413 = sadd.s32 %s411, %s412
        %s414 = smul.addr %s413, 8
        %s415 = scalar_lea.vmem %s4, %s414
      $region52: #{bottleneck_pallas.6} parent=43 // pred_fallthru
        _
    $region44: #{bottleneck_pallas.6} parent=5 // pred_fallthru
      _
  $region6: #{bottleneck_pallas.6} parent=0 // loop_footer
    %s15 = sadd.s32 1, %s11
  $region7: #{bottleneck_pallas.6} parent=0 // loop_footer_branch
    %10 = sbr.rel target = $region3
  $region8: #{bottleneck_pallas.6} parent=0 // loop_exit
    _

// kernel: bottleneck_pallas.7
$region0: #{bottleneck_pallas.7}
  #allocation0 [shape = 'u32[]', space=smem, size = 0x4, offset = 0x4, fixed_abs, tag = 'smem constant byte address 0x4 - core index']
  #allocation1 [shape = 'u32[72,128]{1,0:T(1,128)}', space=vmem, size = 0x9000, scoped, tag = 'internal scratch']
  %s0 = inlined_call_operand.vmem [shape: f32[2,16,256], index: 0, kind: input, shape index: {}]
  %s1 = inlined_call_operand.vmem [shape: f32[2,16,256], index: 1, kind: input, shape index: {}]
  %s2 = inlined_call_operand.vmem [shape: f32[2,16,1], index: 2, kind: input, shape index: {}]
  %s3 = inlined_call_operand.vmem [shape: f32[2,16,256], index: 3, kind: output, shape index: {}]
  %s4 = sld [smem:[#allocation0]]
  $region45: #{bottleneck_pallas.7} parent=0
    _
  %s6 = ssub.s32 1, %s4
  %s7 = scalar_select 0, %s6, %s4
  loop: start=0, step=1, limit=4
  $region2: #{bottleneck_pallas.7} parent=0 // loop_pre_header
    _
  $region3: #{bottleneck_pallas.7} parent=0 // loop_header
    %s9 = sphi 0, %s13
    %p10 = scmp.ge.s32.totalorder %s9, 4
    %s16 = sphi 0, %s28
    %s17 = sphi 0, %s24
    %s18 = sphi 0, %s16
    %s19 = sphi 0, %s17
    %s20 = sphi 0, %s18
    %s21 = sphi 0, %s19
    %s33 = sphi 0, %s35
    %s36 = sphi 0, %s33
    %s37 = sphi 0, %s36
    %s53 = sphi 0, %s37
    %s61 = sphi 0, %s63
    %s64 = sphi 0, %s61
    %s65 = sphi 0, %s64
    %s81 = sphi 0, %s65
    %s85 = sphi 0, %s85
    %s87 = sphi 0, %s85
    %s88 = sphi 0, %s87
    %s102 = sphi 0, %s88
    %s110 = sphi 0, %s112
    %s113 = sphi 0, %s110
    %s114 = sphi 0, %s113
    %s130 = sphi 0, %s114
  $region4: #{bottleneck_pallas.7} parent=0 // loop_header_branch
    %12 = sbr.rel (%p10) target = $region8
  $region5: #{bottleneck_pallas.7} parent=0 // loop_body
    %s14 = ssub.s32 %s9, 1
    %s15 = ssub.s32 %s9, 2
    %s22 = sadd.s32 1, %s17
    %p23 = scmp.ge.s32.totalorder %s22, 1
    %s24 = scalar_select %p23, 0, %s22
    %s25 = sadd.s32 1, %s16
    %s26 = scalar_select %p23, %s25, %s16
    %p27 = scmp.ge.s32.totalorder %s26, 2
    %s28 = scalar_select %p27, 0, %s26
    %s29 = ssub.s32 %s16, %s28
    %s30 = ssub.s32 %s17, %s24
    %s31 = sor.u32 %s29, %s30
    %p32 = scmp.eq.s32.totalorder %s31, 0
    %s34 = sadd.s32 %s33, 1
    %s35 = scalar_select %p32, %s33, %s34
    %p38 = pneg %p32
    %p39 = scmp.eq.s32.totalorder %s9, 1
    %p40 = por %p38, %p39
    %p41 = scmp.ne.s32.totalorder %s33, %s36
    %p42 = scmp.eq.s32.totalorder %s9, 0
    %p43 = por %p41, %p42
    %p44 = scmp.ne.s32.totalorder %s33, %s36
    %p45 = scmp.eq.s32.totalorder %s14, 1
    %p46 = por %p44, %p45
    %p47 = scmp.ne.s32.totalorder %s36, %s37
    %p48 = scmp.eq.s32.totalorder %s14, 0
    %p49 = por %p47, %p48
    %p50 = scmp.ne.s32.totalorder %s36, %s37
    %p51 = scmp.eq.s32.totalorder %s15, 1
    %p52 = por %p50, %p51
    %p54 = scmp.ne.s32.totalorder %s37, %s53
    %p55 = scmp.eq.s32.totalorder %s15, 0
    %p56 = por %p54, %p55
    %s57 = ssub.s32 %s16, %s28
    %s58 = ssub.s32 %s17, %s24
    %s59 = sor.u32 %s57, %s58
    %p60 = scmp.eq.s32.totalorder %s59, 0
    %s62 = sadd.s32 %s61, 1
    %s63 = scalar_select %p60, %s61, %s62
    %p66 = pneg %p60
    %p67 = scmp.eq.s32.totalorder %s9, 1
    %p68 = por %p66, %p67
    %p69 = scmp.ne.s32.totalorder %s61, %s64
    %p70 = scmp.eq.s32.totalorder %s9, 0
    %p71 = por %p69, %p70
    %p72 = scmp.ne.s32.totalorder %s61, %s64
    %p73 = scmp.eq.s32.totalorder %s14, 1
    %p74 = por %p72, %p73
    %p75 = scmp.ne.s32.totalorder %s64, %s65
    %p76 = scmp.eq.s32.totalorder %s14, 0
    %p77 = por %p75, %p76
    %p78 = scmp.ne.s32.totalorder %s64, %s65
    %p79 = scmp.eq.s32.totalorder %s15, 1
    %p80 = por %p78, %p79
    %p82 = scmp.ne.s32.totalorder %s65, %s81
    %p83 = scmp.eq.s32.totalorder %s15, 0
    %p84 = por %p82, %p83
    %s86 = sadd.s32 %s85, 1
    %p89 = scmp.eq.s32.totalorder %s9, 1
    %p90 = scmp.ne.s32.totalorder %s85, %s87
    %p91 = scmp.eq.s32.totalorder %s9, 0
    %p92 = por %p90, %p91
    %p93 = scmp.ne.s32.totalorder %s85, %s87
    %p94 = scmp.eq.s32.totalorder %s14, 1
    %p95 = por %p93, %p94
    %p96 = scmp.ne.s32.totalorder %s87, %s88
    %p97 = scmp.eq.s32.totalorder %s14, 0
    %p98 = por %p96, %p97
    %p99 = scmp.ne.s32.totalorder %s87, %s88
    %p100 = scmp.eq.s32.totalorder %s15, 1
    %p101 = por %p99, %p100
    %p103 = scmp.ne.s32.totalorder %s88, %s102
    %p104 = scmp.eq.s32.totalorder %s15, 0
    %p105 = por %p103, %p104
    %s106 = ssub.s32 %s16, %s28
    %s107 = ssub.s32 %s17, %s24
    %s108 = sor.u32 %s106, %s107
    %p109 = scmp.eq.s32.totalorder %s108, 0
    %s111 = sadd.s32 %s110, 1
    %s112 = scalar_select %p109, %s110, %s111
    %p115 = pneg %p109
    %p116 = scmp.eq.s32.totalorder %s9, 1
    %p117 = por %p115, %p116
    %p118 = scmp.ne.s32.totalorder %s110, %s113
    %p119 = scmp.eq.s32.totalorder %s9, 0
    %p120 = por %p118, %p119
    %p121 = scmp.ne.s32.totalorder %s110, %s113
    %p122 = scmp.eq.s32.totalorder %s14, 1
    %p123 = por %p121, %p122
    %p124 = scmp.ne.s32.totalorder %s113, %s114
    %p125 = scmp.eq.s32.totalorder %s14, 0
    %p126 = por %p124, %p125
    %p127 = scmp.ne.s32.totalorder %s113, %s114
    %p128 = scmp.eq.s32.totalorder %s15, 1
    %p129 = por %p127, %p128
    %p131 = scmp.ne.s32.totalorder %s114, %s130
    %p132 = scmp.eq.s32.totalorder %s15, 0
    %p133 = por %p131, %p132
    %p134 = scmp.le.s32.totalorder 1, %s9
    %p135 = scmp.lt.s32.totalorder %s9, 3
    %p136 = pnand %p134, %p135
    %p137 = pneg %p136
    // Predicated region
    $region9: #{bottleneck_pallas.7} parent=5 // pred_check
      _
    $region10: #{bottleneck_pallas.7} parent=5 // pred_check_branch
      %139 = sbr.rel (%p136) target = $region12
    $region11: #{bottleneck_pallas.7} parent=5 // pred_region
      %s140 = ssub.s32 %s9, 1
      // Predicated region
      $region13: #{bottleneck_pallas.7} parent=11 // pred_check
        %p141 = pneg %p98
      $region14: #{bottleneck_pallas.7} parent=11 // pred_check_branch
        %143 = sbr.rel (%p141) target = $region16
      $region15: #{bottleneck_pallas.7} parent=11 // pred_region
        _
      $region16: #{bottleneck_pallas.7} parent=11 // pred_fallthru
        _
    $region12: #{bottleneck_pallas.7} parent=5 // pred_fallthru
      _
    %p144 = scmp.lt.s32.totalorder %s9, 2
    // Predicated region
    $region17: #{bottleneck_pallas.7} parent=5 // pred_check
      %p145 = pneg %p144
    $region18: #{bottleneck_pallas.7} parent=5 // pred_check_branch
      %147 = sbr.rel (%p145) target = $region20
    $region19: #{bottleneck_pallas.7} parent=5 // pred_region
      // Predicated region
      $region21: #{bottleneck_pallas.7} parent=19 // pred_check
        %p148 = pneg %p43
      $region22: #{bottleneck_pallas.7} parent=19 // pred_check_branch
        %150 = sbr.rel (%p148) target = $region24
      $region23: #{bottleneck_pallas.7} parent=19 // pred_region
        %s151 = smul.u32 2, %s17
        %p152 = scmp.lt.s32.totalorder %s16, 1
        %s153 = scalar_select %p152, %s16, 1
        %p154 = scmp.lt.s32.totalorder %s151, 1
        %s155 = scalar_select %p154, %s151, 1
        %s156 = smul.addr %s153, 4
        %s157 = sadd.s32 %s155, %s156
        %s158 = smul.addr %s157, 8
        %s159 = scalar_lea.vmem %s0, %s158
        %s160 = smul.u32 2, %s17
      $region24: #{bottleneck_pallas.7} parent=19 // pred_fallthru
        _
      // Predicated region
      $region25: #{bottleneck_pallas.7} parent=19 // pred_check
        %p161 = pneg %p71
      $region26: #{bottleneck_pallas.7} parent=19 // pred_check_branch
        %163 = sbr.rel (%p161) target = $region28
      $region27: #{bottleneck_pallas.7} parent=19 // pred_region
        %s164 = smul.u32 2, %s17
        %p165 = scmp.lt.s32.totalorder %s16, 1
        %s166 = scalar_select %p165, %s16, 1
        %p167 = scmp.lt.s32.totalorder %s164, 1
        %s168 = scalar_select %p167, %s164, 1
        %s169 = smul.addr %s166, 4
        %s170 = sadd.s32 %s168, %s169
        %s171 = smul.addr %s170, 8
        %s172 = scalar_lea.vmem %s1, %s171
        %s173 = smul.u32 2, %s17
      $region28: #{bottleneck_pallas.7} parent=19 // pred_fallthru
        _
    $region20: #{bottleneck_pallas.7} parent=5 // pred_fallthru
      _
    %p174 = scmp.le.s32.totalorder 1, %s9
    %p175 = scmp.lt.s32.totalorder %s9, 3
    %p176 = pnand %p174, %p175
    %p177 = pneg %p176
    // Predicated region
    $region29: #{bottleneck_pallas.7} parent=5 // pred_check
      _
    $region30: #{bottleneck_pallas.7} parent=5 // pred_check_branch
      %179 = sbr.rel (%p176) target = $region32
    $region31: #{bottleneck_pallas.7} parent=5 // pred_region
      %s180 = ssub.s32 %s9, 1
      %s181 = smul.u32 2, %s19
      %p182 = scmp.lt.s32.totalorder %s18, 1
      %s183 = scalar_select %p182, %s18, 1
      %p184 = scmp.lt.s32.totalorder %s181, 1
      %s185 = scalar_select %p184, %s181, 1
      %s186 = smul.addr %s183, 4
      %s187 = sadd.s32 %s185, %s186
      %s188 = smul.addr %s187, 8
      %s189 = scalar_lea.vmem %s0, %s188
      %p190 = pneg %p49
      %p191 = pneg %p46
      %s192 = smul.u32 2, %s19
      %p193 = scmp.lt.s32.totalorder %s18, 1
      %s194 = scalar_select %p193, %s18, 1
      %p195 = scmp.lt.s32.totalorder %s192, 1
      %s196 = scalar_select %p195, %s192, 1
      %s197 = smul.addr %s194, 4
      %s198 = sadd.s32 %s196, %s197
      %s199 = smul.addr %s198, 8
      %s200 = scalar_lea.vmem %s1, %s199
      %p201 = pneg %p77
      %p202 = pneg %p74
      %p203 = pneg %p98
      %p204 = pneg %p95
      %p205 = pneg %p126
      %p206 = pneg %p123
      %s207 = smul.u32 2, %s19
      %p208 = scmp.lt.s32.totalorder %s18, 1
      %s209 = scalar_select %p208, %s18, 1
      %p210 = scmp.lt.s32.totalorder %s207, 1
      %s211 = scalar_select %p210, %s207, 1
      %s212 = smul.addr %s209, 4
      %s213 = sadd.s32 %s211, %s212
      %s214 = smul.addr %s213, 8
      %s215 = scalar_lea.vmem %s3, %s214
      %s216 = smul.u32 2, %s19
      %p217 = scmp.lt.s32.totalorder %s18, 1
      %s218 = scalar_select %p217, %s18, 1
      %p219 = scmp.lt.s32.totalorder %s216, 1
      %s220 = scalar_select %p219, %s216, 1
      %s221 = smul.addr %s218, 4
      %s222 = sadd.s32 %s220, %s221
      %s223 = smul.addr %s222, 8
      %s224 = scalar_lea.vmem %s0, %s223
      %s225 = smul.u32 2, %s19
      %s226 = smul.u32 2, %s19
      %p227 = scmp.lt.s32.totalorder %s18, 1
      %s228 = scalar_select %p227, %s18, 1
      %p229 = scmp.lt.s32.totalorder %s226, 1
      %s230 = scalar_select %p229, %s226, 1
      %s231 = smul.addr %s228, 4
      %s232 = sadd.s32 %s230, %s231
      %s233 = smul.addr %s232, 8
      %s234 = scalar_lea.vmem %s1, %s233
      %s235 = smul.u32 2, %s19
      %s236 = smul.u32 2, %s19
      %p237 = scmp.lt.s32.totalorder %s18, 1
      %s238 = scalar_select %p237, %s18, 1
      %p239 = scmp.lt.s32.totalorder %s236, 1
      %s240 = scalar_select %p239, %s236, 1
      %s241 = smul.addr %s238, 4
      %s242 = sadd.s32 %s240, %s241
      %s243 = smul.addr %s242, 8
      %s244 = scalar_lea.vmem %s3, %s243
      %s245 = smul.u32 2, %s19
      %v246 = vld [vmem:[%s2] sm:$0xff]
      %v247 = vld [vmem:[%s2 + $0x8] sm:$0xff]
      %s248 = scalar_lea.vmem %s2, 16
      %v249 = vld [vmem:[%s248] sm:$0xff]
      %v250 = vld [vmem:[%s248 + $0x8] sm:$0xff]
      %v251 = vld [vmem:[%s224] sm:$0xff]
      %v252 = vld [vmem:[%s224 + $0x8] sm:$0xff]
      %v253 = vld [vmem:[%s224 + $0x10] sm:$0xff]
      %v254 = vld [vmem:[%s224 + $0x18] sm:$0xff]
      %256 = vset.pattern.permute.xlu0 0
      %257 = vperm.xlu0 %256, %v246
      %v258 = vpop.permute.xlu0 %257
      %261 = vset.pattern.permute.xlu0 0
      %262 = vperm.xlu0 %261, %v247
      %v263 = vpop.permute.xlu0 %262
      %v265 = vmul.f32 %v251, %v258
      %v266 = vmul.f32 %v252, %v258
      %v267 = vmul.f32 %v253, %v263
      %v268 = vmul.f32 %v254, %v263
      %270 = vset.pattern.permute.xlu0 0
      %271 = vperm.xlu0 %270, %v249
      %v272 = vpop.permute.xlu0 %271
      %275 = vset.pattern.permute.xlu0 0
      %276 = vperm.xlu0 %275, %v250
      %v277 = vpop.permute.xlu0 %276
      %v279 = vadd.f32 %v265, %v272
      %v280 = vadd.f32 %v266, %v272
      %v281 = vadd.f32 %v267, %v277
      %v282 = vadd.f32 %v268, %v277
      %v283 = vld [vmem:[%s234] sm:$0xff]
      %v284 = vld [vmem:[%s234 + $0x8] sm:$0xff]
      %v285 = vld [vmem:[%s234 + $0x10] sm:$0xff]
      %v286 = vld [vmem:[%s234 + $0x18] sm:$0xff]
      %v287 = vadd.f32 %v279, %v283
      %v288 = vadd.f32 %v280, %v284
      %v289 = vadd.f32 %v281, %v285
      %v290 = vadd.f32 %v282, %v286
      %v291 = vmax.f32 %v287, 0.0
      %v292 = vmax.f32 %v288, 0.0
      %v293 = vmax.f32 %v289, 0.0
      %v294 = vmax.f32 %v290, 0.0
      %295 = vst [vmem:[%s244] sm:$0xff] %v291
      %296 = vst [vmem:[%s244 + $0x8] sm:$0xff] %v292
      %297 = vst [vmem:[%s244 + $0x10] sm:$0xff] %v293
      %298 = vst [vmem:[%s244 + $0x18] sm:$0xff] %v294
      %s299 = smul.u32 2, %s19
      %p300 = scmp.lt.s32.totalorder %s18, 1
      %s301 = scalar_select %p300, %s18, 1
      %p302 = scmp.lt.s32.totalorder %s299, 1
      %s303 = scalar_select %p302, %s299, 1
      %s304 = smul.addr %s301, 4
      %s305 = sadd.s32 %s303, %s304
      %s306 = smul.addr %s305, 8
      %s307 = scalar_lea.vmem %s3, %s306
      // Predicated region
      $region33: #{bottleneck_pallas.7} parent=31 // pred_check
        %p308 = pneg %p123
      $region34: #{bottleneck_pallas.7} parent=31 // pred_check_branch
        %310 = sbr.rel (%p308) target = $region36
      $region35: #{bottleneck_pallas.7} parent=31 // pred_region
        %s311 = smul.u32 2, %s19
      $region36: #{bottleneck_pallas.7} parent=31 // pred_fallthru
        _
    $region32: #{bottleneck_pallas.7} parent=5 // pred_fallthru
      _
    %p312 = scmp.le.s32.totalorder 2, %s9
    // Predicated region
    $region37: #{bottleneck_pallas.7} parent=5 // pred_check
      %p313 = pneg %p312
    $region38: #{bottleneck_pallas.7} parent=5 // pred_check_branch
      %315 = sbr.rel (%p313) target = $region40
    $region39: #{bottleneck_pallas.7} parent=5 // pred_region
      %s316 = ssub.s32 %s9, 2
      // Predicated region
      $region41: #{bottleneck_pallas.7} parent=39 // pred_check
        %p317 = pneg %p129
      $region42: #{bottleneck_pallas.7} parent=39 // pred_check_branch
        %319 = sbr.rel (%p317) target = $region44
      $region43: #{bottleneck_pallas.7} parent=39 // pred_region
        %s320 = smul.u32 2, %s21
        %p321 = scmp.lt.s32.totalorder %s20, 1
        %s322 = scalar_select %p321, %s20, 1
        %p323 = scmp.lt.s32.totalorder %s320, 1
        %s324 = scalar_select %p323, %s320, 1
        %s325 = smul.addr %s322, 4
        %s326 = sadd.s32 %s324, %s325
        %s327 = smul.addr %s326, 8
        %s328 = scalar_lea.vmem %s3, %s327
      $region44: #{bottleneck_pallas.7} parent=39 // pred_fallthru
        _
    $region40: #{bottleneck_pallas.7} parent=5 // pred_fallthru
      _
  $region6: #{bottleneck_pallas.7} parent=0 // loop_footer
    %s13 = sadd.s32 1, %s9
  $region7: #{bottleneck_pallas.7} parent=0 // loop_footer_branch
    %8 = sbr.rel target = $region3
  $region8: #{bottleneck_pallas.7} parent=0 // loop_exit
    _

// kernel: bottleneck_pallas.5
$region0: #{bottleneck_pallas.5}
  #allocation0 [shape = 'u32[]', space=smem, size = 0x4, offset = 0x4, fixed_abs, tag = 'smem constant byte address 0x4 - core index']
  #allocation1 [shape = 'u32[72,128]{1,0:T(1,128)}', space=vmem, size = 0x9000, scoped, tag = 'internal scratch']
  #allocation2 [shape = 'f32[12,256]{1,0:T(8,128)}', space=vmem, size = 0x4000, scoped, tag = 'scratch operand']
  %s0 = inlined_call_operand.vmem [shape: f32[2,4,288], index: 0, kind: input, shape index: {}]
  %s1 = inlined_call_operand.vmem [shape: f32[2,4,1], index: 1, kind: input, shape index: {}]
  %s2 = inlined_call_operand.vmem [shape: f32[3,4,12], index: 2, kind: input, shape index: {}]
  %s3 = inlined_call_operand.vmem [shape: f32[2,4,256], index: 3, kind: output, shape index: {0}]
  %s4 = inlined_call_operand.vmem [shape: f32[2,4,2], index: 4, kind: output, shape index: {1}]
  %5 = xla_tuple %s3, %s4
  %s6 = sld [smem:[#allocation0]]
  $region53: #{bottleneck_pallas.5} parent=0
    _
  %s8 = ssub.s32 1, %s6
  %s9 = scalar_select 0, %s8, %s6
  loop: start=0, step=1, limit=4
  $region2: #{bottleneck_pallas.5} parent=0 // loop_pre_header
    _
  $region3: #{bottleneck_pallas.5} parent=0 // loop_header
    %s11 = sphi 0, %s15
    %p12 = scmp.ge.s32.totalorder %s11, 4
    %s21 = sphi 0, %s23
    %s24 = sphi 0, %s21
    %s25 = sphi 0, %s24
    %s41 = sphi 0, %s25
    %s45 = sphi 0, %s45
    %s47 = sphi 0, %s45
    %s48 = sphi 0, %s47
    %s62 = sphi 0, %s48
    %s66 = sphi 0, %s66
    %s68 = sphi 0, %s66
    %s69 = sphi 0, %s68
    %s83 = sphi 0, %s69
    %s89 = sphi 0, %s91
    %s92 = sphi 0, %s89
    %s93 = sphi 0, %s92
    %s109 = sphi 0, %s93
    %s115 = sphi 0, %s117
    %s118 = sphi 0, %s115
    %s119 = sphi 0, %s118
    %s135 = sphi 0, %s119
  $region4: #{bottleneck_pallas.5} parent=0 // loop_header_branch
    %14 = sbr.rel (%p12) target = $region8
  $region5: #{bottleneck_pallas.5} parent=0 // loop_body
    %s16 = ssub.s32 %s11, 1
    %s17 = ssub.s32 %s11, 2
    %s18 = sadd.s32 %s11, 1
    %s19 = ssub.s32 %s11, %s18
    %p20 = scmp.eq.s32.totalorder %s19, 0
    %s22 = sadd.s32 %s21, 1
    %s23 = scalar_select %p20, %s21, %s22
    %p26 = pneg %p20
    %p27 = scmp.eq.s32.totalorder %s11, 1
    %p28 = por %p26, %p27
    %p29 = scmp.ne.s32.totalorder %s21, %s24
    %p30 = scmp.eq.s32.totalorder %s11, 0
    %p31 = por %p29, %p30
    %p32 = scmp.ne.s32.totalorder %s21, %s24
    %p33 = scmp.eq.s32.totalorder %s16, 1
    %p34 = por %p32, %p33
    %p35 = scmp.ne.s32.totalorder %s24, %s25
    %p36 = scmp.eq.s32.totalorder %s16, 0
    %p37 = por %p35, %p36
    %p38 = scmp.ne.s32.totalorder %s24, %s25
    %p39 = scmp.eq.s32.totalorder %s17, 1
    %p40 = por %p38, %p39
    %p42 = scmp.ne.s32.totalorder %s25, %s41
    %p43 = scmp.eq.s32.totalorder %s17, 0
    %p44 = por %p42, %p43
    %s46 = sadd.s32 %s45, 1
    %p49 = scmp.eq.s32.totalorder %s11, 1
    %p50 = scmp.ne.s32.totalorder %s45, %s47
    %p51 = scmp.eq.s32.totalorder %s11, 0
    %p52 = por %p50, %p51
    %p53 = scmp.ne.s32.totalorder %s45, %s47
    %p54 = scmp.eq.s32.totalorder %s16, 1
    %p55 = por %p53, %p54
    %p56 = scmp.ne.s32.totalorder %s47, %s48
    %p57 = scmp.eq.s32.totalorder %s16, 0
    %p58 = por %p56, %p57
    %p59 = scmp.ne.s32.totalorder %s47, %s48
    %p60 = scmp.eq.s32.totalorder %s17, 1
    %p61 = por %p59, %p60
    %p63 = scmp.ne.s32.totalorder %s48, %s62
    %p64 = scmp.eq.s32.totalorder %s17, 0
    %p65 = por %p63, %p64
    %s67 = sadd.s32 %s66, 1
    %p70 = scmp.eq.s32.totalorder %s11, 1
    %p71 = scmp.ne.s32.totalorder %s66, %s68
    %p72 = scmp.eq.s32.totalorder %s11, 0
    %p73 = por %p71, %p72
    %p74 = scmp.ne.s32.totalorder %s66, %s68
    %p75 = scmp.eq.s32.totalorder %s16, 1
    %p76 = por %p74, %p75
    %p77 = scmp.ne.s32.totalorder %s68, %s69
    %p78 = scmp.eq.s32.totalorder %s16, 0
    %p79 = por %p77, %p78
    %p80 = scmp.ne.s32.totalorder %s68, %s69
    %p81 = scmp.eq.s32.totalorder %s17, 1
    %p82 = por %p80, %p81
    %p84 = scmp.ne.s32.totalorder %s69, %s83
    %p85 = scmp.eq.s32.totalorder %s17, 0
    %p86 = por %p84, %p85
    %s87 = ssub.s32 %s11, %s18
    %p88 = scmp.eq.s32.totalorder %s87, 0
    %s90 = sadd.s32 %s89, 1
    %s91 = scalar_select %p88, %s89, %s90
    %p94 = pneg %p88
    %p95 = scmp.eq.s32.totalorder %s11, 1
    %p96 = por %p94, %p95
    %p97 = scmp.ne.s32.totalorder %s89, %s92
    %p98 = scmp.eq.s32.totalorder %s11, 0
    %p99 = por %p97, %p98
    %p100 = scmp.ne.s32.totalorder %s89, %s92
    %p101 = scmp.eq.s32.totalorder %s16, 1
    %p102 = por %p100, %p101
    %p103 = scmp.ne.s32.totalorder %s92, %s93
    %p104 = scmp.eq.s32.totalorder %s16, 0
    %p105 = por %p103, %p104
    %p106 = scmp.ne.s32.totalorder %s92, %s93
    %p107 = scmp.eq.s32.totalorder %s17, 1
    %p108 = por %p106, %p107
    %p110 = scmp.ne.s32.totalorder %s93, %s109
    %p111 = scmp.eq.s32.totalorder %s17, 0
    %p112 = por %p110, %p111
    %s113 = ssub.s32 %s11, %s18
    %p114 = scmp.eq.s32.totalorder %s113, 0
    %s116 = sadd.s32 %s115, 1
    %s117 = scalar_select %p114, %s115, %s116
    %p120 = pneg %p114
    %p121 = scmp.eq.s32.totalorder %s11, 1
    %p122 = por %p120, %p121
    %p123 = scmp.ne.s32.totalorder %s115, %s118
    %p124 = scmp.eq.s32.totalorder %s11, 0
    %p125 = por %p123, %p124
    %p126 = scmp.ne.s32.totalorder %s115, %s118
    %p127 = scmp.eq.s32.totalorder %s16, 1
    %p128 = por %p126, %p127
    %p129 = scmp.ne.s32.totalorder %s118, %s119
    %p130 = scmp.eq.s32.totalorder %s16, 0
    %p131 = por %p129, %p130
    %p132 = scmp.ne.s32.totalorder %s118, %s119
    %p133 = scmp.eq.s32.totalorder %s17, 1
    %p134 = por %p132, %p133
    %p136 = scmp.ne.s32.totalorder %s119, %s135
    %p137 = scmp.eq.s32.totalorder %s17, 0
    %p138 = por %p136, %p137
    %p139 = scmp.le.s32.totalorder 1, %s11
    %p140 = scmp.lt.s32.totalorder %s11, 3
    %p141 = pnand %p139, %p140
    %p142 = pneg %p141
    // Predicated region
    $region9: #{bottleneck_pallas.5} parent=5 // pred_check
      _
    $region10: #{bottleneck_pallas.5} parent=5 // pred_check_branch
      %144 = sbr.rel (%p141) target = $region12
    $region11: #{bottleneck_pallas.5} parent=5 // pred_region
      %s145 = ssub.s32 %s11, 1
      // Predicated region
      $region13: #{bottleneck_pallas.5} parent=11 // pred_check
        %p146 = pneg %p58
      $region14: #{bottleneck_pallas.5} parent=11 // pred_check_branch
        %148 = sbr.rel (%p146) target = $region16
      $region15: #{bottleneck_pallas.5} parent=11 // pred_region
        _
      $region16: #{bottleneck_pallas.5} parent=11 // pred_fallthru
        _
      // Predicated region
      $region17: #{bottleneck_pallas.5} parent=11 // pred_check
        %p149 = pneg %p79
      $region18: #{bottleneck_pallas.5} parent=11 // pred_check_branch
        %151 = sbr.rel (%p149) target = $region20
      $region19: #{bottleneck_pallas.5} parent=11 // pred_region
        _
      $region20: #{bottleneck_pallas.5} parent=11 // pred_fallthru
        _
    $region12: #{bottleneck_pallas.5} parent=5 // pred_fallthru
      _
    %p152 = scmp.lt.s32.totalorder %s11, 2
    // Predicated region
    $region21: #{bottleneck_pallas.5} parent=5 // pred_check
      %p153 = pneg %p152
    $region22: #{bottleneck_pallas.5} parent=5 // pred_check_branch
      %155 = sbr.rel (%p153) target = $region24
    $region23: #{bottleneck_pallas.5} parent=5 // pred_region
      // Predicated region
      $region25: #{bottleneck_pallas.5} parent=23 // pred_check
        %p156 = pneg %p31
      $region26: #{bottleneck_pallas.5} parent=23 // pred_check_branch
        %158 = sbr.rel (%p156) target = $region28
      $region27: #{bottleneck_pallas.5} parent=23 // pred_region
        %p159 = scmp.lt.s32.totalorder %s11, 1
        %s160 = scalar_select %p159, %s11, 1
        %s161 = smul.addr %s160, 3
        %s162 = smul.addr %s161, 4
        %s163 = scalar_lea.vmem %s0, %s162
      $region28: #{bottleneck_pallas.5} parent=23 // pred_fallthru
        _
    $region24: #{bottleneck_pallas.5} parent=5 // pred_fallthru
      _
    %p164 = scmp.le.s32.totalorder 1, %s11
    %p165 = scmp.lt.s32.totalorder %s11, 3
    %p166 = pnand %p164, %p165
    %p167 = pneg %p166
    // Predicated region
    $region29: #{bottleneck_pallas.5} parent=5 // pred_check
      _
    $region30: #{bottleneck_pallas.5} parent=5 // pred_check_branch
      %169 = sbr.rel (%p166) target = $region32
    $region31: #{bottleneck_pallas.5} parent=5 // pred_region
      %s170 = ssub.s32 %s11, 1
      %p171 = scmp.lt.s32.totalorder %s16, 1
      %s172 = scalar_select %p171, %s16, 1
      %s173 = smul.addr %s172, 3
      %s174 = smul.addr %s173, 4
      %s175 = scalar_lea.vmem %s0, %s174
      %p176 = pneg %p37
      %p177 = pneg %p34
      %p178 = pneg %p58
      %p179 = pneg %p55
      %p180 = pneg %p79
      %p181 = pneg %p76
      %p182 = pneg %p105
      %p183 = pneg %p102
      %p184 = scmp.lt.s32.totalorder %s16, 1
      %s185 = scalar_select %p184, %s16, 1
      %s186 = smul.addr %s185, 2
      %s187 = smul.addr %s186, 4
      %s188 = scalar_lea.vmem %s3, %s187
      %p189 = pneg %p131
      %p190 = pneg %p128
      %p191 = scmp.lt.s32.totalorder %s16, 1
      %s192 = scalar_select %p191, %s16, 1
      %s193 = smul.addr %s192, 4
      %s194 = scalar_lea.vmem %s4, %s193
      %p195 = scmp.lt.s32.totalorder %s16, 1
      %s196 = scalar_select %p195, %s16, 1
      %s197 = smul.addr %s196, 3
      %s198 = smul.addr %s197, 4
      %s199 = scalar_lea.vmem %s0, %s198
      %p200 = scmp.lt.s32.totalorder %s16, 1
      %s201 = scalar_select %p200, %s16, 1
      %s202 = smul.addr %s201, 2
      %s203 = smul.addr %s202, 4
      %s204 = scalar_lea.vmem %s3, %s203
      %p205 = scmp.lt.s32.totalorder %s16, 1
      %s206 = scalar_select %p205, %s16, 1
      %s207 = smul.addr %s206, 4
      %s208 = scalar_lea.vmem %s4, %s207
      %v210 = vld [vmem:[%s199] sm:$0xff]
      %v211 = vld [vmem:[%s199 + $0x8] sm:$0xf]
      %v212 = vld [vmem:[%s1] sm:$0xf]
      %s213 = scalar_lea.vmem %s1, 4
      %v214 = vld [vmem:[%s213] sm:$0xf]
      %216 = vset.pattern.permute.xlu0 0
      %217 = vperm.xlu0 %216, %v212
      %v218 = vpop.permute.xlu0 %217
      %v220 = vunpack.c.l.s4 839922192
      %v221 = vunpack.c.0.s8 %v220
      %v222 = vperm.slane %v218, %v221
      %v224 = vmul.f32 %v210, %v222
      %v225 = vmul.f32 %v211, %v222
      %227 = vset.pattern.permute.xlu0 0
      %228 = vperm.xlu0 %227, %v214
      %v229 = vpop.permute.xlu0 %228
      %v231 = vunpack.c.l.s4 839922192
      %v232 = vunpack.c.0.s8 %v231
      %v233 = vperm.slane %v229, %v232
      %v235 = vadd.f32 %v224, %v233
      %v236 = vadd.f32 %v225, %v233
      %v237 = vmax.f32 %v235, 0.0
      %v238 = vmax.f32 %v236, 0.0
      %v239 = vlaneseq
      %v240 = vand.u32 %v239, 127
      %v241 = vadd.s32 %v240, 128
      %v242 = vadd.s32 %v240, 256
      %vm243 = vcmp.ge.s32.totalorder %v240, 16
      %vm244 = vcmp.ge.s32.totalorder %v241, 16
      %vm245 = vcmp.ge.s32.totalorder %v242, 16
      %vm246 = vcmp.lt.s32.totalorder %v240, 272
      %vm247 = vcmp.lt.s32.totalorder %v241, 272
      %vm248 = vcmp.lt.s32.totalorder %v242, 272
      %vm249 = vmand %vm243, %vm246
      %vm250 = vmand %vm244, %vm247
      %vm251 = vmand %vm245, %vm248
      %v252 = vsel %vm249, 1, 0
      %v253 = vsel %vm250, 1, 0
      %v254 = vsel %vm251, 1, 0
      %vm255 = vcmp.eq.s32.totalorder %v252, 1
      %vm256 = vcmp.eq.s32.totalorder %v253, 1
      %vm257 = vcmp.eq.s32.totalorder %v254, 1
      %260 = vst [vmem:[#allocation1] ss:$2 sm:$0xff] %v237
      %s261 = scalar_lea.vmem [#allocation1], 16
      %262 = vst [vmem:[%s261] ss:$2 sm:$0xff] %v238
      %v263 = vld.sshfl [vmem:[#allocation1] sm:$0xff pattern:$0x75316420]
      %v264 = vld.sshfl [vmem:[#allocation1 + $0x8] sm:$0xff pattern:$0x75316420]
      %v265 = vld.sshfl [vmem:[#allocation1 + $0x10] sm:$0xff pattern:$0x75316420]
      %v269 = vsel %vm255, %v263, 0.0
      %v270 = vsel %vm256, %v264, 0.0
      %v271 = vsel %vm257, %v265, 0.0
      %272 = vst [vmem:[#allocation2] sm:$0xf] %v269
      %273 = vst [vmem:[#allocation2 + $0x8] sm:$0xf] %v270
      %v277 = vrot.slane %v269, 4
      %v278 = vrot.slane %v270, 4
      %v279 = vrot.slane %v271, 4
      %280 = vrot.lane.b32.xlu0 %v277, 112
      %v281 = vpop.permute.xlu0 %280
      %282 = vrot.lane.b32.xlu0 %v278, 112
      %v283 = vpop.permute.xlu0 %282
      %284 = vrot.lane.b32.xlu0 %v279, 112
      %v285 = vpop.permute.xlu0 %284
      %vm286 = vcmask 916480
      %v287 = vsel %vm286, %v281, %v283
      %v288 = vsel %vm286, %v283, %v285
      %291 = vst [vmem:[#allocation2] sm:$0xf0] %v287
      %292 = vst [vmem:[#allocation2 + $0x8] sm:$0xf0] %v288
      %293 = vrot.lane.b32.xlu0 %v269, 96
      %v294 = vpop.permute.xlu0 %293
      %295 = vrot.lane.b32.xlu0 %v270, 96
      %v296 = vpop.permute.xlu0 %295
      %297 = vrot.lane.b32.xlu0 %v271, 96
      %v298 = vpop.permute.xlu0 %297
      %vm299 = vcmask 785408
      %v300 = vsel %vm299, %v294, %v296
      %v301 = vsel %vm299, %v296, %v298
      %304 = vst [vmem:[#allocation2 + $0x10] sm:$0xf] %v300
      %305 = vst [vmem:[#allocation2 + $0x18] sm:$0xf] %v301
      %v306 = vld [vmem:[#allocation2] sm:$0xff]
      %v307 = vld [vmem:[#allocation2 + $0x8] sm:$0xff]
      %v308 = vld [vmem:[#allocation2 + $0x10] sm:$0xf]
      %v309 = vld [vmem:[#allocation2 + $0x18] sm:$0xf]
      %vm310 = vcmp.lt.s32.totalorder %v240, 0
      %v311 = vsub.s32 0, %v240
      %v312 = vsel %vm310, %v311, %v240
      %v313 = vshrl.u32 %v312, 4
      %v314 = vand.u32 %v312, 15
      %v315 = vsub.s32 0, %v314
      %v316 = vsel %vm310, %v315, %v314
      %vm317 = vcmp.lt.s32.totalorder %v241, 0
      %v318 = vsub.s32 0, %v241
      %v319 = vsel %vm317, %v318, %v241
      %v320 = vshrl.u32 %v319, 4
      %v321 = vand.u32 %v319, 15
      %v322 = vsub.s32 0, %v321
      %v323 = vsel %vm317, %v322, %v321
      %vm324 = vcmp.ne.s32.totalorder %v316, 0
      %vm325 = vcmp.ne.s32.totalorder %v323, 0
      %vm326 = vcmp.lt.s32.totalorder %v316, 0
      %vm327 = vcmp.lt.s32.totalorder %v323, 0
      %vm328 = vmand %vm326, %vm324
      %vm329 = vmand %vm327, %vm325
      %v330 = vadd.s32 %v316, 16
      %v331 = vadd.s32 %v323, 16
      %v332 = vsel %vm328, %v330, %v316
      %v333 = vsel %vm329, %v331, %v323
      %v334 = vld [vmem:[%s2] sm:$0xf]
      %v335 = vpack.c.bf16 %v334, %v334
      %340 = vrot.lane.b32.xlu0 %v306, 1
      %v341 = vpop.permute.xlu0 %340
      %342 = vrot.lane.b32.xlu0 %v307, 1
      %v343 = vpop.permute.xlu0 %342
      %344 = vrot.lane.b32.xlu0 %v308, 1
      %v345 = vpop.permute.xlu0 %344
      %346 = vrot.lane.b32.xlu0 %v309, 1
      %v347 = vpop.permute.xlu0 %346
      %vm348 = vcmask 7168
      %v349 = vsel %vm348, %v341, %v343
      %v350 = vsel %vm348, %v345, %v347
      %v355 = vsel %vm348, 0.0, %v341
      %v356 = vsel %vm348, 0.0, %v345
      %vm357 = vcmp.ge.s32.totalorder %v332, 1
      %vm358 = vcmp.ge.s32.totalorder %v333, 1
      %v359 = vsel %vm357, 1, 0
      %v360 = vsel %vm358, 1, 0
      %vm361 = vcmp.eq.s32.totalorder %v359, 1
      %vm362 = vcmp.eq.s32.totalorder %v360, 1
      %v363 = vsel %vm361, %v355, 0.0
      %v364 = vsel %vm362, %v349, 0.0
      %v365 = vsel %vm361, %v356, 0.0
      %v366 = vsel %vm362, %v350, 0.0
      %v367 = vpack.c.bf16 %v365, %v363
      %v368 = vpack.c.bf16 %v366, %v364
      %s369 = scalar_lea.vmem %s2, 4
      %v370 = vld [vmem:[%s369] sm:$0xf]
      %v371 = vpack.c.bf16 %v370, %v370
      %v372 = vpack.c.bf16 %v308, %v306
      %v373 = vpack.c.bf16 %v309, %v307
      %vm374 = vcmask 97280
      %v376 = vsel %vm374, %v371, 0
      %vm378 = vcmask 1045504
      %v380 = vsel %vm378, %v372, 0
      %v383 = vsel %vm378, %v373, 0
      %385 = vmatpush.bf16.msra.mxu0 0
      %386 = vmatpush.bf16.msra.mxu0 0
      %387 = vmatpush.bf16.msra.mxu0 0
      %388 = vmatpush.bf16.msra.mxu0 0
      %389 = vmatpush.bf16.msra.mxu0 0
      %390 = vmatpush.bf16.msra.mxu0 0
      %391 = vmatpush.bf16.msra.mxu0 0
      %392 = vmatpush.bf16.msra.mxu0 %v380
      %393 = vmatmul.bf16.gmra.mxu0 %v376
      %v394 = vpop.f32.mrf.mxu0
      %v395 = vadd.f32 0.0, %v394
      %v396 = vpop.f32.mrf.mxu0
      %397 = vdwg.mxu0
      %398 = vmatpush.bf16.msra.mxu0 0
      %399 = vmatpush.bf16.msra.mxu0 0
      %400 = vmatpush.bf16.msra.mxu0 0
      %401 = vmatpush.bf16.msra.mxu0 0
      %402 = vmatpush.bf16.msra.mxu0 0
      %403 = vmatpush.bf16.msra.mxu0 0
      %404 = vmatpush.bf16.msra.mxu0 0
      %405 = vmatpush.bf16.msra.mxu0 %v383
      %406 = vmatmul.bf16.gmra.mxu0 %v376
      %v407 = vpop.f32.mrf.mxu0
      %v408 = vadd.f32 0.0, %v407
      %v409 = vpop.f32.mrf.mxu0
      %410 = vdwg.mxu0
      %v412 = vsel %vm374, %v335, 0
      %v415 = vsel %vm378, %v367, 0
      %v418 = vsel %vm378, %v368, 0
      %420 = vmatpush.bf16.msra.mxu0 0
      %421 = vmatpush.bf16.msra.mxu0 0
      %422 = vmatpush.bf16.msra.mxu0 0
      %423 = vmatpush.bf16.msra.mxu0 0
      %424 = vmatpush.bf16.msra.mxu0 0
      %425 = vmatpush.bf16.msra.mxu0 0
      %426 = vmatpush.bf16.msra.mxu0 0
      %427 = vmatpush.bf16.msra.mxu0 %v415
      %428 = vmatmul.bf16.gmra.mxu0 %v412
      %v429 = vpop.f32.mrf.mxu0
      %v430 = vadd.f32 %v395, %v429
      %v431 = vpop.f32.mrf.mxu0
      %432 = vdwg.mxu0
      %433 = vmatpush.bf16.msra.mxu0 0
      %434 = vmatpush.bf16.msra.mxu0 0
      %435 = vmatpush.bf16.msra.mxu0 0
      %436 = vmatpush.bf16.msra.mxu0 0
      %437 = vmatpush.bf16.msra.mxu0 0
      %438 = vmatpush.bf16.msra.mxu0 0
      %439 = vmatpush.bf16.msra.mxu0 0
      %440 = vmatpush.bf16.msra.mxu0 %v418
      %441 = vmatmul.bf16.gmra.mxu0 %v412
      %v442 = vpop.f32.mrf.mxu0
      %v443 = vadd.f32 %v408, %v442
      %v444 = vpop.f32.mrf.mxu0
      %445 = vdwg.mxu0
      %s446 = scalar_lea.vmem %s2, 8
      %v447 = vld [vmem:[%s446] sm:$0xf]
      %v448 = vpack.c.bf16 %v447, %v447
      %449 = vrot.lane.b32.xlu0 %v306, 127
      %v450 = vpop.permute.xlu0 %449
      %451 = vrot.lane.b32.xlu0 %v307, 127
      %v452 = vpop.permute.xlu0 %451
      %453 = vrot.lane.b32.xlu0 %v308, 127
      %v454 = vpop.permute.xlu0 %453
      %455 = vrot.lane.b32.xlu0 %v309, 127
      %v456 = vpop.permute.xlu0 %455
      %vm457 = vcmask 1039360
      %v458 = vsel %vm457, %v450, %v452
      %v459 = vsel %vm457, %v454, %v456
      %v464 = vsel %vm457, %v452, 0.0
      %v465 = vsel %vm457, %v456, 0.0
      %vm466 = vcmp.lt.s32.totalorder %v332, 15
      %vm467 = vcmp.lt.s32.totalorder %v333, 15
      %v468 = vsel %vm466, 1, 0
      %v469 = vsel %vm467, 1, 0
      %vm470 = vcmp.eq.s32.totalorder %v468, 1
      %vm471 = vcmp.eq.s32.totalorder %v469, 1
      %v472 = vsel %vm470, %v458, 0.0
      %v473 = vsel %vm471, %v464, 0.0
      %v474 = vsel %vm470, %v459, 0.0
      %v475 = vsel %vm471, %v465, 0.0
      %v476 = vpack.c.bf16 %v474, %v472
      %v477 = vpack.c.bf16 %v475, %v473
      %v479 = vsel %vm374, %v448, 0
      %v482 = vsel %vm378, %v476, 0
      %v485 = vsel %vm378, %v477, 0
      %487 = vmatpush.bf16.msra.mxu0 0
      %488 = vmatpush.bf16.msra.mxu0 0
      %489 = vmatpush.bf16.msra.mxu0 0
      %490 = vmatpush.bf16.msra.mxu0 0
      %491 = vmatpush.bf16.msra.mxu0 0
      %492 = vmatpush.bf16.msra.mxu0 0
      %493 = vmatpush.bf16.msra.mxu0 0
      %494 = vmatpush.bf16.msra.mxu0 %v482
      %495 = vmatmul.bf16.gmra.mxu0 %v479
      %v496 = vpop.f32.mrf.mxu0
      %v497 = vadd.f32 0.0, %v496
      %v498 = vpop.f32.mrf.mxu0
      %499 = vdwg.mxu0
      %500 = vmatpush.bf16.msra.mxu0 0
      %501 = vmatpush.bf16.msra.mxu0 0
      %502 = vmatpush.bf16.msra.mxu0 0
      %503 = vmatpush.bf16.msra.mxu0 0
      %504 = vmatpush.bf16.msra.mxu0 0
      %505 = vmatpush.bf16.msra.mxu0 0
      %506 = vmatpush.bf16.msra.mxu0 0
      %507 = vmatpush.bf16.msra.mxu0 %v485
      %508 = vmatmul.bf16.gmra.mxu0 %v479
      %v509 = vpop.f32.mrf.mxu0
      %v510 = vadd.f32 0.0, %v509
      %v511 = vpop.f32.mrf.mxu0
      %512 = vdwg.mxu0
      %v513 = vadd.f32 %v430, %v497
      %v514 = vadd.f32 %v443, %v510
      %v517 = vrot.slane %v514, 4
      %vm518 = vcmask 1043456
      %v519 = vsel %vm518, %v513, %v517
      %521 = vst [vmem:[%s204] sm:$0xff] %v519
      %v522 = vsel %vm518, %v513, 0.0
      %v523 = vsel %vm518, %v514, 0.0
      %v524 = vadd.f32 %v522, %v523
      %525 = vadd.xlane.f32.xlu0 %v524
      %v526 = vpop.xlane.xlu0 %525
      %v527 = vmul.f32 %v513, %v513
      %v528 = vmul.f32 %v514, %v514
      %v529 = vsel %vm518, %v527, 0.0
      %v530 = vsel %vm518, %v528, 0.0
      %v531 = vadd.f32 %v529, %v530
      %532 = vadd.xlane.f32.xlu0 %v531
      %v533 = vpop.xlane.xlu0 %532
      %v534 = vsel %vm348, %v526, %v533
      %vm535 = vcmask 11264
      %536 = vst.msk [vmem:[%s208] sm:$0xf] %vm535, %v534
      %p537 = scmp.lt.s32.totalorder %s16, 1
      %s538 = scalar_select %p537, %s16, 1
      %s539 = smul.addr %s538, 2
      %s540 = smul.addr %s539, 4
      %s541 = scalar_lea.vmem %s3, %s540
      %p542 = scmp.lt.s32.totalorder %s16, 1
      %s543 = scalar_select %p542, %s16, 1
      %s544 = smul.addr %s543, 4
      %s545 = scalar_lea.vmem %s4, %s544
      // Predicated region
      $region33: #{bottleneck_pallas.5} parent=31 // pred_check
        %p546 = pneg %p102
      $region34: #{bottleneck_pallas.5} parent=31 // pred_check_branch
        %548 = sbr.rel (%p546) target = $region36
      $region35: #{bottleneck_pallas.5} parent=31 // pred_region
        _
      $region36: #{bottleneck_pallas.5} parent=31 // pred_fallthru
        _
      // Predicated region
      $region37: #{bottleneck_pallas.5} parent=31 // pred_check
        %p549 = pneg %p128
      $region38: #{bottleneck_pallas.5} parent=31 // pred_check_branch
        %551 = sbr.rel (%p549) target = $region40
      $region39: #{bottleneck_pallas.5} parent=31 // pred_region
        _
      $region40: #{bottleneck_pallas.5} parent=31 // pred_fallthru
        _
    $region32: #{bottleneck_pallas.5} parent=5 // pred_fallthru
      _
    %p552 = scmp.le.s32.totalorder 2, %s11
    // Predicated region
    $region41: #{bottleneck_pallas.5} parent=5 // pred_check
      %p553 = pneg %p552
    $region42: #{bottleneck_pallas.5} parent=5 // pred_check_branch
      %555 = sbr.rel (%p553) target = $region44
    $region43: #{bottleneck_pallas.5} parent=5 // pred_region
      %s556 = ssub.s32 %s11, 2
      // Predicated region
      $region45: #{bottleneck_pallas.5} parent=43 // pred_check
        %p557 = pneg %p108
      $region46: #{bottleneck_pallas.5} parent=43 // pred_check_branch
        %559 = sbr.rel (%p557) target = $region48
      $region47: #{bottleneck_pallas.5} parent=43 // pred_region
        %p560 = scmp.lt.s32.totalorder %s17, 1
        %s561 = scalar_select %p560, %s17, 1
        %s562 = smul.addr %s561, 2
        %s563 = smul.addr %s562, 4
        %s564 = scalar_lea.vmem %s3, %s563
      $region48: #{bottleneck_pallas.5} parent=43 // pred_fallthru
        _
      // Predicated region
      $region49: #{bottleneck_pallas.5} parent=43 // pred_check
        %p565 = pneg %p134
      $region50: #{bottleneck_pallas.5} parent=43 // pred_check_branch
        %567 = sbr.rel (%p565) target = $region52
      $region51: #{bottleneck_pallas.5} parent=43 // pred_region
        %p568 = scmp.lt.s32.totalorder %s17, 1
        %s569 = scalar_select %p568, %s17, 1
        %s570 = smul.addr %s569, 4
        %s571 = scalar_lea.vmem %s4, %s570
      $region52: #{bottleneck_pallas.5} parent=43 // pred_fallthru
        _
    $region44: #{bottleneck_pallas.5} parent=5 // pred_fallthru
      _
  $region6: #{bottleneck_pallas.5} parent=0 // loop_footer
    %s15 = sadd.s32 1, %s11
  $region7: #{bottleneck_pallas.5} parent=0 // loop_footer_branch
    %10 = sbr.rel target = $region3
  $region8: #{bottleneck_pallas.5} parent=0 // loop_exit
    _

</llo_original>
